<compile_context>
chip_gen: v7x
topology: tpu7x:2x2x1
jax: 0.10.0
libtpu: 0.0.40
codegen_flags: <defaults>
</compile_context>

<pallas_src>
import jax
import jax.numpy as jnp
import numpy as np
from jax import lax
from jax.experimental import pallas as pl
from jax.experimental.pallas import tpu as pltpu

# ---- shapes implied by SimpleCNN (3x32x32 input; fc1 = Linear(32*8*8, 128)) --------------
CIN, C1, C2 = 3, 16, 32          # input / conv1 / conv2 channels
H = W = 32                       # conv1 output spatial size (3x3, stride 1, pad 1)
H1 = W1 = 16                     # after pool1 == conv2 spatial size
H2 = W2 = 8                      # after pool2
HW = H * W                       # 1024 conv1 output pixels
P1N = H1 * W1                    # 256  conv2 output pixels
K1 = 9 * CIN                     # 27   (kh, kw, cin folded into one contraction)
K2 = 9 * C1                      # 144
FLAT = C2 * H2 * W2              # 2048 fc1 input features
PAD = W1 + 1                     # 17 = max |lane shift| for the in-kernel 3x3 taps


# ============================ kernel 1: conv1+pool1+conv2+pool2 ==========================
def _convpool_kernel(xs_ref, w1_ref, b1_ref, w2_ref, b2_ref, sel_ref, out_ref):
    # ---- conv1: one MXU dot, channel-major, pixel lanes in pool-permuted order ----------
    y1 = jnp.dot(w1_ref[...], xs_ref[0], preferred_element_type=jnp.float32)   # (16, 1024)
    y1 = jnp.maximum(y1 + b1_ref[...], 0.0)                                    # bias + relu
    # 2x2 / stride-2 max pool == two aligned slice-maxes (lanes were permuted in glue)
    z = jnp.maximum(y1[:, :HW // 2], y1[:, HW // 2:])                          # w pairs
    p1 = jnp.maximum(z[:, :P1N], z[:, P1N:]).astype(jnp.bfloat16)              # (16,256), lane=h*16+w

    # ---- conv2 im2col built in-registers: 9 lane-shifted taps of p1 ----------------------
    zb = jnp.zeros((C1, PAD), jnp.bfloat16)
    q = jnp.concatenate([zb, p1, zb], axis=1)                                  # (16, 256+2*PAD)
    w_idx = lax.broadcasted_iota(jnp.int32, (C1, P1N), 1) % W1
    taps = []
    for kh in range(3):
        for kw in range(3):
            d = (kh - 1) * W1 + (kw - 1)
            t = q[:, PAD + d: PAD + d + P1N]               # p1 shifted by d lanes, zero halo
            if kw == 0:                                    # left tap invalid at w == 0
                t = jnp.where(w_idx > 0, t, jnp.zeros_like(t))
            elif kw == 2:                                  # right tap invalid at w == W1-1
                t = jnp.where(w_idx < W1 - 1, t, jnp.zeros_like(t))
            taps.append(t)
    x2 = jnp.concatenate(taps, axis=0)                                         # (144, 256) bf16

    # ---- conv2: one MXU dot ---------------------------------------------------------------
    y2 = jnp.dot(w2_ref[...], x2, preferred_element_type=jnp.float32)          # (32, 256)
    y2 = jnp.maximum(y2 + b2_ref[...], 0.0)
    # 2x2 / stride-2 max pool: max over the {0, +1, +W1, +W1+1} lane shifts, then compact the
    # 256 pixels to the 64 pooled positions (already in torch NCHW flatten order) with a
    # constant 0/1 selection matmul.
    zf = jnp.zeros((C2, PAD), jnp.float32)
    qy = jnp.concatenate([y2, zf], axis=1)                                     # (32, 256+PAD)
    m = jnp.maximum(jnp.maximum(qy[:, 0:P1N], qy[:, 1:P1N + 1]),
                    jnp.maximum(qy[:, W1:P1N + W1], qy[:, W1 + 1:P1N + W1 + 1]))
    p2 = jnp.dot(m.astype(jnp.bfloat16), sel_ref[...],
                 preferred_element_type=jnp.float32)                           # (32, 64)
    out_ref[0] = p2.astype(out_ref.dtype)


def _conv1_im2col(x_nchw):
    """(B, 3, 32, 32) -> (B, 27, 1024) bf16 im2col, pixel lanes in pool-permuted order.

    K order = (kh, kw, cin); lane order = (w%2)*512 + (h%2)*256 + (h//2)*16 + (w//2), so the
    in-kernel 2x2 pool is two 128-aligned slice maxes and the pooled result comes out in
    natural (h//2, w//2) row-major order.
    """
    B = x_nchw.shape[0]
    xp = jnp.pad(x_nchw, ((0, 0), (0, 0), (1, 1), (1, 1)))
    taps = [xp[:, :, kh:kh + H, kw:kw + W] for kh in range(3) for kw in range(3)]
    xs = jnp.stack(taps, axis=1).reshape(B, K1, H, W)            # k = (kh*3+kw)*CIN + cin
    parts = [xs[:, :, hp::2, wp::2] for wp in (0, 1) for hp in (0, 1)]
    xs = jnp.stack(parts, axis=2).reshape(B, K1, HW)
    return xs.astype(jnp.bfloat16)


def conv_stack(xs1, prep):
    B = xs1.shape[0]
    return pl.pallas_call(
        _convpool_kernel,
        out_shape=jax.ShapeDtypeStruct((B, C2, H2 * W2), jnp.bfloat16),
        grid=(B,),
        in_specs=[
            pl.BlockSpec((1, K1, HW), lambda b: (b, 0, 0)),          # per-image im2col
            pl.BlockSpec((C1, K1), lambda b: (0, 0)),                # conv1 weights (resident)
            pl.BlockSpec((C1, 1), lambda b: (0, 0)),
            pl.BlockSpec((C2, K2), lambda b: (0, 0)),                # conv2 weights (resident)
            pl.BlockSpec((C2, 1), lambda b: (0, 0)),
            pl.BlockSpec((P1N, H2 * W2), lambda b: (0, 0)),          # pool selection matrix
        ],
        out_specs=pl.BlockSpec((1, C2, H2 * W2), lambda b: (b, 0, 0)),
        compiler_params=pltpu.CompilerParams(dimension_semantics=("parallel",)),
    )(xs1, prep['w1t'], prep['b1'], prep['w2t'], prep['b2'], prep['sel'])


# ================================= kernel 2: fc1 + relu + fc2 ============================
def fc_head(x_flat, prep):
    B = x_flat.shape[0]
    n_out = prep['fc2_wt'].shape[1]

    def kernel(x_ref, w1_ref, b1_ref, w2_ref, b2_ref, o_ref):
        h = jnp.dot(x_ref[...], w1_ref[...], preferred_element_type=jnp.float32) + b1_ref[...]
        h = jnp.maximum(h, 0.0).astype(jnp.bfloat16)
        o_ref[...] = jnp.dot(h, w2_ref[...], preferred_element_type=jnp.float32) + b2_ref[...]

    return pl.pallas_call(
        kernel,
        out_shape=jax.ShapeDtypeStruct((B, n_out), jnp.float32),
    )(x_flat, prep['fc1_wt'], prep['fc1_b'], prep['fc2_wt'], prep['fc2_b'])


# ============================== parameter prep (once, outside jit) =======================
def prepare_params(p):
    # conv weights -> (Cout, 9*Cin) with K ordered (kh, kw, cin), bf16 for the MXU
    w1t = jnp.transpose(p['conv1_w'], (0, 2, 3, 1)).reshape(C1, K1).astype(jnp.bfloat16)
    w2t = jnp.transpose(p['conv2_w'], (0, 2, 3, 1)).reshape(C2, K2).astype(jnp.bfloat16)
    b1 = p['conv1_b'].reshape(C1, 1).astype(jnp.float32)
    b2 = p['conv2_b'].reshape(C2, 1).astype(jnp.float32)
    # 0/1 matrix compacting the 256 conv2 pixels to the 64 pooled positions, emitted in
    # torch's NCHW view(B,-1) order (c*64 + hh*8 + ww).
    sel = np.zeros((P1N, H2 * W2), np.float32)
    j = np.arange(H2 * W2)
    sel[2 * (j // W2) * W1 + 2 * (j % W2), j] = 1.0
    return dict(
        w1t=w1t, b1=b1, w2t=w2t, b2=b2, sel=jnp.asarray(sel, jnp.bfloat16),
        fc1_wt=jnp.transpose(p['fc1_w']).astype(jnp.bfloat16),      # (2048, 128) bf16
        fc1_b=p['fc1_b'].reshape(1, -1).astype(jnp.float32),
        fc2_wt=jnp.transpose(p['fc2_w']).astype(jnp.bfloat16),      # (128, 10) bf16
        fc2_b=p['fc2_b'].reshape(1, -1).astype(jnp.float32),
    )


def simple_cnn_forward(x_nchw, prep):
    assert x_nchw.shape[1:] == (CIN, H, W)
    B = x_nchw.shape[0]
    xs1 = _conv1_im2col(x_nchw.astype(jnp.float32))      # only glue: one small im2col fusion
    y = conv_stack(xs1, prep)                            # (B, 32, 64) bf16, torch flatten order
    return fc_head(y.reshape(B, FLAT), prep)             # contiguous reshape = bitcast


# ===================================== reference & main ==================================
def reference_forward(x_nchw, p):
    """Pure-JAX f32 reference mirroring the PyTorch forward exactly."""
    def conv(x, w, b):
        y = lax.conv_general_dilated(x, w, window_strides=(1, 1),
                                     padding=((1, 1), (1, 1)),
                                     dimension_numbers=('NCHW', 'OIHW', 'NCHW'))
        return jax.nn.relu(y + b[None, :, None, None])

    def pool(x):
        return lax.reduce_window(x, -jnp.inf, lax.max,
                                 (1, 1, 2, 2), (1, 1, 2, 2), 'VALID')

    y = pool(conv(x_nchw, p['conv1_w'], p['conv1_b']))
    y = pool(conv(y, p['conv2_w'], p['conv2_b']))
    y = y.reshape(y.shape[0], -1)
    y = jax.nn.relu(y @ p['fc1_w'].T + p['fc1_b'])
    return y @ p['fc2_w'].T + p['fc2_b']


if __name__ == "__main__":
    key = jax.random.PRNGKey(0)
    ks = jax.random.split(key, 9)
    params = {
        'conv1_w': 0.05 * jax.random.normal(ks[0], (C1, CIN, 3, 3), jnp.float32),
        'conv1_b': 0.05 * jax.random.normal(ks[1], (C1,), jnp.float32),
        'conv2_w': 0.05 * jax.random.normal(ks[2], (C2, C1, 3, 3), jnp.float32),
        'conv2_b': 0.05 * jax.random.normal(ks[3], (C2,), jnp.float32),
        'fc1_w': 0.02 * jax.random.normal(ks[4], (128, FLAT), jnp.float32),
        'fc1_b': 0.02 * jax.random.normal(ks[5], (128,), jnp.float32),
        'fc2_w': 0.05 * jax.random.normal(ks[6], (10, 128), jnp.float32),
        'fc2_b': 0.05 * jax.random.normal(ks[7], (10,), jnp.float32),
    }
    # SimpleCNN's fc1 implies a 3x32x32 input (32*8*8 features after two 2x2 pools).
    x = jax.random.normal(ks[8], (2, CIN, H, W), jnp.float32)

    prep = prepare_params(params)                       # one-time weight repack, outside jit
    fwd = jax.jit(simple_cnn_forward)
    out = jax.block_until_ready(fwd(x, prep))

    ref = reference_forward(x, params)
    assert out.shape == (2, 10) and out.dtype == jnp.float32
    # bf16 matmul inputs with f32 accumulation through two convs + two fcs: within 2e-2.
    np.testing.assert_allclose(np.asarray(out), np.asarray(ref), rtol=2e-2, atol=2e-2)
    print("KERNEL_OK")
</pallas_src>

<mosaic_0001>
module attributes {stable_mosaic.version = 11 : i64} {
  func.func @_convpool_kernel(%arg0: i32, %arg1: memref<1x27x1024xbf16, #tpu.memory_space<vmem>>, %arg2: memref<16x27xbf16, #tpu.memory_space<vmem>>, %arg3: memref<16x1xf32, #tpu.memory_space<vmem>>, %arg4: memref<32x144xbf16, #tpu.memory_space<vmem>>, %arg5: memref<32x1xf32, #tpu.memory_space<vmem>>, %arg6: memref<256x64xbf16, #tpu.memory_space<vmem>>, %arg7: memref<1x32x64xbf16, #tpu.memory_space<vmem>>) attributes {dimension_semantics = [#tpu.dimension_semantics<parallel>], iteration_bounds = array<i64: 2>, scalar_prefetch = 0 : i64, scratch_operands = 0 : i64, tpu.core_type = #tpu.core_type<tc>, window_params = [{transform_indices = @transform_0, window_bounds = array<i64: 1, 27, 1024>}, {pipeline_mode = #tpu.pipeline_mode<synchronous>, transform_indices = @transform_1, window_bounds = array<i64: 16, 27>}, {pipeline_mode = #tpu.pipeline_mode<synchronous>, transform_indices = @transform_2, window_bounds = array<i64: 16, 1>}, {pipeline_mode = #tpu.pipeline_mode<synchronous>, transform_indices = @transform_3, window_bounds = array<i64: 32, 144>}, {pipeline_mode = #tpu.pipeline_mode<synchronous>, transform_indices = @transform_4, window_bounds = array<i64: 32, 1>}, {pipeline_mode = #tpu.pipeline_mode<synchronous>, transform_indices = @transform_5, window_bounds = array<i64: 256, 64>}, {transform_indices = @transform_6, window_bounds = array<i64: 1, 32, 64>}]} {
    %c0 = arith.constant 0 : index
    %c0_0 = arith.constant 0 : index
    %0 = vector.load %arg2[%c0, %c0_0] : memref<16x27xbf16, #tpu.memory_space<vmem>>, vector<16x27xbf16>
    %c0_1 = arith.constant 0 : index
    %c0_2 = arith.constant 0 : index
    %c0_3 = arith.constant 0 : index
    %1 = vector.load %arg1[%c0_1, %c0_2, %c0_3] : memref<1x27x1024xbf16, #tpu.memory_space<vmem>>, vector<1x27x1024xbf16>
    %2 = vector.shape_cast %1 : vector<1x27x1024xbf16> to vector<27x1024xbf16>
    %cst = arith.constant dense<0.000000e+00> : vector<16x1024xf32>
    %3 = tpu.matmul %0, %2, %cst {dimension_numbers = #tpu.dot_dimension_numbers<[1], [0], [0], [1], [0, 0, 1, 1], [], []>} : vector<16x27xbf16>, vector<27x1024xbf16>, vector<16x1024xf32> -> vector<16x1024xf32>
    %c0_4 = arith.constant 0 : index
    %c0_5 = arith.constant 0 : index
    %4 = vector.load %arg3[%c0_4, %c0_5] : memref<16x1xf32, #tpu.memory_space<vmem>>, vector<16x1xf32>
    %5 = vector.broadcast %4 : vector<16x1xf32> to vector<16x1024xf32>
    %6 = arith.addf %3, %5 : vector<16x1024xf32>
    %cst_6 = arith.constant 0.000000e+00 : f32
    %7 = vector.broadcast %cst_6 : f32 to vector<16x1024xf32>
    %8 = arith.maximumf %6, %7 : vector<16x1024xf32>
    %9 = vector.extract_strided_slice %8 {offsets = [0, 0], sizes = [16, 512], strides = [1, 1]} : vector<16x1024xf32> to vector<16x512xf32>
    %10 = vector.extract_strided_slice %8 {offsets = [0, 512], sizes = [16, 512], strides = [1, 1]} : vector<16x1024xf32> to vector<16x512xf32>
    %11 = arith.maximumf %9, %10 : vector<16x512xf32>
    %12 = vector.extract_strided_slice %11 {offsets = [0, 0], sizes = [16, 256], strides = [1, 1]} : vector<16x512xf32> to vector<16x256xf32>
    %13 = vector.extract_strided_slice %11 {offsets = [0, 256], sizes = [16, 256], strides = [1, 1]} : vector<16x512xf32> to vector<16x256xf32>
    %14 = arith.maximumf %12, %13 : vector<16x256xf32>
    %15 = arith.truncf %14 : vector<16x256xf32> to vector<16x256xbf16>
    %cst_7 = arith.constant 0.000000e+00 : bf16
    %16 = vector.broadcast %cst_7 : bf16 to vector<16x17xbf16>
    %17 = tpu.concatenate %16, %15, %16 in 1 : vector<16x17xbf16>, vector<16x256xbf16>, vector<16x17xbf16> -> vector<16x290xbf16>
    %18 = tpu.iota {dimensions = array<i32: 1>} : vector<16x256xi32>
    %c16_i32 = arith.constant 16 : i32
    %c0_i32 = arith.constant 0 : i32
    %19 = arith.cmpi eq, %c16_i32, %c0_i32 : i32
    %c1_i32 = arith.constant 1 : i32
    %20 = arith.select %19, %c1_i32, %c16_i32 : i32
    %21 = vector.broadcast %20 : i32 to vector<16x256xi32>
    %22 = arith.remsi %18, %21 : vector<16x256xi32>
    %c0_i32_8 = arith.constant 0 : i32
    %23 = vector.broadcast %c0_i32_8 : i32 to vector<16x256xi32>
    %24 = arith.cmpi ne, %22, %23 : vector<16x256xi32>
    %c0_i32_9 = arith.constant 0 : i32
    %25 = vector.broadcast %c0_i32_9 : i32 to vector<16x256xi32>
    %26 = arith.cmpi slt, %22, %25 : vector<16x256xi32>
    %c0_i32_10 = arith.constant 0 : i32
    %27 = arith.cmpi slt, %20, %c0_i32_10 : i32
    %28 = vector.broadcast %27 : i1 to vector<16x256xi1>
    %29 = vector.broadcast %28 : vector<16x256xi1> to vector<16x256xi1>
    %30 = arith.xori %26, %29 : vector<16x256xi1>
    %31 = arith.andi %30, %24 : vector<16x256xi1>
    %32 = vector.broadcast %20 : i32 to vector<16x256xi32>
    %33 = arith.addi %22, %32 : vector<16x256xi32>
    %34 = arith.select %31, %33, %22 : vector<16x256xi1>, vector<16x256xi32>
    %35 = vector.extract_strided_slice %17 {offsets = [0, 0], sizes = [16, 256], strides = [1, 1]} : vector<16x290xbf16> to vector<16x256xbf16>
    %c0_i32_11 = arith.constant 0 : i32
    %36 = vector.broadcast %c0_i32_11 : i32 to vector<16x256xi32>
    %37 = arith.cmpi sgt, %34, %36 : vector<16x256xi32>
    %cst_12 = arith.constant 0.000000e+00 : bf16
    %38 = vector.broadcast %cst_12 : bf16 to vector<16x256xbf16>
    %39 = arith.select %37, %35, %38 : vector<16x256xi1>, vector<16x256xbf16>
    %40 = vector.extract_strided_slice %17 {offsets = [0, 1], sizes = [16, 256], strides = [1, 1]} : vector<16x290xbf16> to vector<16x256xbf16>
    %41 = vector.extract_strided_slice %17 {offsets = [0, 2], sizes = [16, 256], strides = [1, 1]} : vector<16x290xbf16> to vector<16x256xbf16>
    %c15_i32 = arith.constant 15 : i32
    %42 = vector.broadcast %c15_i32 : i32 to vector<16x256xi32>
    %43 = arith.cmpi slt, %34, %42 : vector<16x256xi32>
    %cst_13 = arith.constant 0.000000e+00 : bf16
    %44 = vector.broadcast %cst_13 : bf16 to vector<16x256xbf16>
    %45 = arith.select %43, %41, %44 : vector<16x256xi1>, vector<16x256xbf16>
    %46 = vector.extract_strided_slice %17 {offsets = [0, 16], sizes = [16, 256], strides = [1, 1]} : vector<16x290xbf16> to vector<16x256xbf16>
    %c0_i32_14 = arith.constant 0 : i32
    %47 = vector.broadcast %c0_i32_14 : i32 to vector<16x256xi32>
    %48 = arith.cmpi sgt, %34, %47 : vector<16x256xi32>
    %cst_15 = arith.constant 0.000000e+00 : bf16
    %49 = vector.broadcast %cst_15 : bf16 to vector<16x256xbf16>
    %50 = arith.select %48, %46, %49 : vector<16x256xi1>, vector<16x256xbf16>
    %51 = vector.extract_strided_slice %17 {offsets = [0, 17], sizes = [16, 256], strides = [1, 1]} : vector<16x290xbf16> to vector<16x256xbf16>
    %52 = vector.extract_strided_slice %17 {offsets = [0, 18], sizes = [16, 256], strides = [1, 1]} : vector<16x290xbf16> to vector<16x256xbf16>
    %c15_i32_16 = arith.constant 15 : i32
    %53 = vector.broadcast %c15_i32_16 : i32 to vector<16x256xi32>
    %54 = arith.cmpi slt, %34, %53 : vector<16x256xi32>
    %cst_17 = arith.constant 0.000000e+00 : bf16
    %55 = vector.broadcast %cst_17 : bf16 to vector<16x256xbf16>
    %56 = arith.select %54, %52, %55 : vector<16x256xi1>, vector<16x256xbf16>
    %57 = vector.extract_strided_slice %17 {offsets = [0, 32], sizes = [16, 256], strides = [1, 1]} : vector<16x290xbf16> to vector<16x256xbf16>
    %c0_i32_18 = arith.constant 0 : i32
    %58 = vector.broadcast %c0_i32_18 : i32 to vector<16x256xi32>
    %59 = arith.cmpi sgt, %34, %58 : vector<16x256xi32>
    %cst_19 = arith.constant 0.000000e+00 : bf16
    %60 = vector.broadcast %cst_19 : bf16 to vector<16x256xbf16>
    %61 = arith.select %59, %57, %60 : vector<16x256xi1>, vector<16x256xbf16>
    %62 = vector.extract_strided_slice %17 {offsets = [0, 33], sizes = [16, 256], strides = [1, 1]} : vector<16x290xbf16> to vector<16x256xbf16>
    %63 = vector.extract_strided_slice %17 {offsets = [0, 34], sizes = [16, 256], strides = [1, 1]} : vector<16x290xbf16> to vector<16x256xbf16>
    %c15_i32_20 = arith.constant 15 : i32
    %64 = vector.broadcast %c15_i32_20 : i32 to vector<16x256xi32>
    %65 = arith.cmpi slt, %34, %64 : vector<16x256xi32>
    %cst_21 = arith.constant 0.000000e+00 : bf16
    %66 = vector.broadcast %cst_21 : bf16 to vector<16x256xbf16>
    %67 = arith.select %65, %63, %66 : vector<16x256xi1>, vector<16x256xbf16>
    %68 = tpu.concatenate %39, %40, %45, %50, %51, %56, %61, %62, %67 in 0 : vector<16x256xbf16>, vector<16x256xbf16>, vector<16x256xbf16>, vector<16x256xbf16>, vector<16x256xbf16>, vector<16x256xbf16>, vector<16x256xbf16>, vector<16x256xbf16>, vector<16x256xbf16> -> vector<144x256xbf16>
    %c0_22 = arith.constant 0 : index
    %c0_23 = arith.constant 0 : index
    %69 = vector.load %arg4[%c0_22, %c0_23] : memref<32x144xbf16, #tpu.memory_space<vmem>>, vector<32x144xbf16>
    %cst_24 = arith.constant dense<0.000000e+00> : vector<32x256xf32>
    %70 = tpu.matmul %69, %68, %cst_24 {dimension_numbers = #tpu.dot_dimension_numbers<[1], [0], [0], [1], [0, 0, 1, 1], [], []>} : vector<32x144xbf16>, vector<144x256xbf16>, vector<32x256xf32> -> vector<32x256xf32>
    %c0_25 = arith.constant 0 : index
    %c0_26 = arith.constant 0 : index
    %71 = vector.load %arg5[%c0_25, %c0_26] : memref<32x1xf32, #tpu.memory_space<vmem>>, vector<32x1xf32>
    %72 = vector.broadcast %71 : vector<32x1xf32> to vector<32x256xf32>
    %73 = arith.addf %70, %72 : vector<32x256xf32>
    %cst_27 = arith.constant 0.000000e+00 : f32
    %74 = vector.broadcast %cst_27 : f32 to vector<32x256xf32>
    %75 = arith.maximumf %73, %74 : vector<32x256xf32>
    %cst_28 = arith.constant 0.000000e+00 : f32
    %76 = vector.broadcast %cst_28 : f32 to vector<32x17xf32>
    %77 = tpu.concatenate %75, %76 in 1 : vector<32x256xf32>, vector<32x17xf32> -> vector<32x273xf32>
    %78 = vector.extract_strided_slice %77 {offsets = [0, 0], sizes = [32, 256], strides = [1, 1]} : vector<32x273xf32> to vector<32x256xf32>
    %79 = vector.extract_strided_slice %77 {offsets = [0, 1], sizes = [32, 256], strides = [1, 1]} : vector<32x273xf32> to vector<32x256xf32>
    %80 = arith.maximumf %78, %79 : vector<32x256xf32>
    %81 = vector.extract_strided_slice %77 {offsets = [0, 16], sizes = [32, 256], strides = [1, 1]} : vector<32x273xf32> to vector<32x256xf32>
    %82 = vector.extract_strided_slice %77 {offsets = [0, 17], sizes = [32, 256], strides = [1, 1]} : vector<32x273xf32> to vector<32x256xf32>
    %83 = arith.maximumf %81, %82 : vector<32x256xf32>
    %84 = arith.maximumf %80, %83 : vector<32x256xf32>
    %85 = arith.truncf %84 : vector<32x256xf32> to vector<32x256xbf16>
    %c0_29 = arith.constant 0 : index
    %c0_30 = arith.constant 0 : index
    %86 = vector.load %arg6[%c0_29, %c0_30] : memref<256x64xbf16, #tpu.memory_space<vmem>>, vector<256x64xbf16>
    %cst_31 = arith.constant dense<0.000000e+00> : vector<32x64xf32>
    %87 = tpu.matmul %85, %86, %cst_31 {dimension_numbers = #tpu.dot_dimension_numbers<[1], [0], [0], [1], [0, 0, 1, 1], [], []>} : vector<32x256xbf16>, vector<256x64xbf16>, vector<32x64xf32> -> vector<32x64xf32>
    %88 = arith.truncf %87 : vector<32x64xf32> to vector<32x64xbf16>
    %c0_32 = arith.constant 0 : index
    %c0_33 = arith.constant 0 : index
    %c0_34 = arith.constant 0 : index
    %89 = vector.load %arg7[%c0_32, %c0_33, %c0_34] : memref<1x32x64xbf16, #tpu.memory_space<vmem>>, vector<1x32x64xbf16>
    %90 = vector.shape_cast %89 : vector<1x32x64xbf16> to vector<32x64xbf16>
    %91 = vector.shape_cast %88 : vector<32x64xbf16> to vector<1x32x64xbf16>
    tpu.vector_store %arg7[%c0_32, %c0_33, %c0_34], %91 {strides = array<i32>} : memref<1x32x64xbf16, #tpu.memory_space<vmem>>, vector<1x32x64xbf16>,
    return
  }
  func.func @transform_0(%arg0: i32) -> (i32, i32, i32) {
    %c0_i32 = arith.constant 0 : i32
    %c0_i32_0 = arith.constant 0 : i32
    %c0_i32_1 = arith.constant 0 : i32
    return %arg0, %c0_i32, %c0_i32_0 : i32, i32, i32
  }
  func.func @transform_1(%arg0: i32) -> (i32, i32) {
    %c0_i32 = arith.constant 0 : i32
    %c0_i32_0 = arith.constant 0 : i32
    %c0_i32_1 = arith.constant 0 : i32
    return %c0_i32, %c0_i32_0 : i32, i32
  }
  func.func @transform_2(%arg0: i32) -> (i32, i32) {
    %c0_i32 = arith.constant 0 : i32
    %c0_i32_0 = arith.constant 0 : i32
    %c0_i32_1 = arith.constant 0 : i32
    return %c0_i32, %c0_i32_0 : i32, i32
  }
  func.func @transform_3(%arg0: i32) -> (i32, i32) {
    %c0_i32 = arith.constant 0 : i32
    %c0_i32_0 = arith.constant 0 : i32
    %c0_i32_1 = arith.constant 0 : i32
    return %c0_i32, %c0_i32_0 : i32, i32
  }
  func.func @transform_4(%arg0: i32) -> (i32, i32) {
    %c0_i32 = arith.constant 0 : i32
    %c0_i32_0 = arith.constant 0 : i32
    %c0_i32_1 = arith.constant 0 : i32
    return %c0_i32, %c0_i32_0 : i32, i32
  }
  func.func @transform_5(%arg0: i32) -> (i32, i32) {
    %c0_i32 = arith.constant 0 : i32
    %c0_i32_0 = arith.constant 0 : i32
    %c0_i32_1 = arith.constant 0 : i32
    return %c0_i32, %c0_i32_0 : i32, i32
  }
  func.func @transform_6(%arg0: i32) -> (i32, i32, i32) {
    %c0_i32 = arith.constant 0 : i32
    %c0_i32_0 = arith.constant 0 : i32
    %c0_i32_1 = arith.constant 0 : i32
    return %arg0, %c0_i32, %c0_i32_0 : i32, i32, i32
  }
}

module attributes {stable_mosaic.version = 11 : i64} {
  func.func @kernel(%arg0: memref<2x2048xbf16, #tpu.memory_space<vmem>>, %arg1: memref<2048x128xbf16, #tpu.memory_space<vmem>>, %arg2: memref<1x128xf32, #tpu.memory_space<vmem>>, %arg3: memref<128x10xbf16, #tpu.memory_space<vmem>>, %arg4: memref<1x10xf32, #tpu.memory_space<vmem>>, %arg5: memref<2x10xf32, #tpu.memory_space<vmem>>) attributes {dimension_semantics = [], scalar_prefetch = 0 : i64, scratch_operands = 0 : i64, tpu.core_type = #tpu.core_type<tc>} {
    %c0 = arith.constant 0 : index
    %c0_0 = arith.constant 0 : index
    %0 = vector.load %arg0[%c0, %c0_0] : memref<2x2048xbf16, #tpu.memory_space<vmem>>, vector<2x2048xbf16>
    %c0_1 = arith.constant 0 : index
    %c0_2 = arith.constant 0 : index
    %1 = vector.load %arg1[%c0_1, %c0_2] : memref<2048x128xbf16, #tpu.memory_space<vmem>>, vector<2048x128xbf16>
    %cst = arith.constant dense<0.000000e+00> : vector<2x128xf32>
    %2 = tpu.matmul %0, %1, %cst {dimension_numbers = #tpu.dot_dimension_numbers<[1], [0], [0], [1], [0, 0, 1, 1], [], []>} : vector<2x2048xbf16>, vector<2048x128xbf16>, vector<2x128xf32> -> vector<2x128xf32>
    %c0_3 = arith.constant 0 : index
    %c0_4 = arith.constant 0 : index
    %3 = vector.load %arg2[%c0_3, %c0_4] : memref<1x128xf32, #tpu.memory_space<vmem>>, vector<1x128xf32>
    %4 = vector.broadcast %3 : vector<1x128xf32> to vector<2x128xf32>
    %5 = arith.addf %2, %4 : vector<2x128xf32>
    %cst_5 = arith.constant 0.000000e+00 : f32
    %6 = vector.broadcast %cst_5 : f32 to vector<2x128xf32>
    %7 = arith.maximumf %5, %6 : vector<2x128xf32>
    %8 = arith.truncf %7 : vector<2x128xf32> to vector<2x128xbf16>
    %c0_6 = arith.constant 0 : index
    %c0_7 = arith.constant 0 : index
    %9 = vector.load %arg3[%c0_6, %c0_7] : memref<128x10xbf16, #tpu.memory_space<vmem>>, vector<128x10xbf16>
    %cst_8 = arith.constant dense<0.000000e+00> : vector<2x10xf32>
    %10 = tpu.matmul %8, %9, %cst_8 {dimension_numbers = #tpu.dot_dimension_numbers<[1], [0], [0], [1], [0, 0, 1, 1], [], []>} : vector<2x128xbf16>, vector<128x10xbf16>, vector<2x10xf32> -> vector<2x10xf32>
    %c0_9 = arith.constant 0 : index
    %c0_10 = arith.constant 0 : index
    %11 = vector.load %arg4[%c0_9, %c0_10] : memref<1x10xf32, #tpu.memory_space<vmem>>, vector<1x10xf32>
    %12 = vector.broadcast %11 : vector<1x10xf32> to vector<2x10xf32>
    %13 = arith.addf %10, %12 : vector<2x10xf32>
    %c0_11 = arith.constant 0 : index
    %c0_12 = arith.constant 0 : index
    %14 = vector.load %arg5[%c0_11, %c0_12] : memref<2x10xf32, #tpu.memory_space<vmem>>, vector<2x10xf32>
    tpu.vector_store %arg5[%c0_11, %c0_12], %13 {strides = array<i32>} : memref<2x10xf32, #tpu.memory_space<vmem>>, vector<2x10xf32>,
    return
  }
}

</mosaic_0001>

<llo_original>
// kernel: simple_cnn_forward.2
$region0: #{simple_cnn_forward.2}
  #allocation0 [shape = 'u32[]', space=smem, size = 0x4, offset = 0x4, fixed_abs, tag = 'smem constant byte address 0x4 - core index']
  #allocation1 [shape = 'u32[144,128]{1,0:T(1,128)}', space=vmem, size = 0x12000, scoped, tag = 'internal scratch']
  %s0 = inlined_call_operand.vmem [shape: bf16[2,27,1024], index: 0, kind: input, shape index: {}]
  %s1 = inlined_call_operand.vmem [shape: bf16[16,27], index: 1, kind: input, shape index: {}]
  %s2 = inlined_call_operand.vmem [shape: f32[16,1], index: 2, kind: input, shape index: {}]
  %s3 = inlined_call_operand.vmem [shape: bf16[32,144], index: 3, kind: input, shape index: {}]
  %s4 = inlined_call_operand.vmem [shape: f32[32,1], index: 4, kind: input, shape index: {}]
  %s5 = inlined_call_operand.vmem [shape: bf16[256,64], index: 5, kind: input, shape index: {}]
  %s6 = inlined_call_operand.vmem [shape: bf16[2,32,64], index: 6, kind: output, shape index: {}]
  %s7 = sld [smem:[#allocation0]]
  $region57: #{simple_cnn_forward.2} parent=0
    _
  %s9 = ssub.s32 1, %s7
  %s10 = scalar_select 0, %s9, %s7
  loop: start=0, step=1, limit=4
  $region2: #{simple_cnn_forward.2} parent=0 // loop_pre_header
    _
  $region3: #{simple_cnn_forward.2} parent=0 // loop_header
    %s12 = sphi 0, %s16
    %p13 = scmp.ge.s32.totalorder %s12, 4
    %s22 = sphi 0, %s24
    %s25 = sphi 0, %s22
    %s26 = sphi 0, %s25
    %s42 = sphi 0, %s26
    %s46 = sphi 0, %s46
    %s48 = sphi 0, %s46
    %s49 = sphi 0, %s48
    %s63 = sphi 0, %s49
    %s67 = sphi 0, %s67
    %s69 = sphi 0, %s67
    %s70 = sphi 0, %s69
    %s84 = sphi 0, %s70
    %s88 = sphi 0, %s88
    %s90 = sphi 0, %s88
    %s91 = sphi 0, %s90
    %s105 = sphi 0, %s91
    %s109 = sphi 0, %s109
    %s111 = sphi 0, %s109
    %s112 = sphi 0, %s111
    %s126 = sphi 0, %s112
    %s130 = sphi 0, %s130
    %s132 = sphi 0, %s130
    %s133 = sphi 0, %s132
    %s147 = sphi 0, %s133
    %s153 = sphi 0, %s155
    %s156 = sphi 0, %s153
    %s157 = sphi 0, %s156
    %s173 = sphi 0, %s157
  $region4: #{simple_cnn_forward.2} parent=0 // loop_header_branch
    %15 = sbr.rel (%p13) target = $region8
  $region5: #{simple_cnn_forward.2} parent=0 // loop_body
    %s17 = ssub.s32 %s12, 1
    %s18 = ssub.s32 %s12, 2
    %s19 = sadd.s32 %s12, 1
    %s20 = ssub.s32 %s12, %s19
    %p21 = scmp.eq.s32.totalorder %s20, 0
    %s23 = sadd.s32 %s22, 1
    %s24 = scalar_select %p21, %s22, %s23
    %p27 = pneg %p21
    %p28 = scmp.eq.s32.totalorder %s12, 1
    %p29 = por %p27, %p28
    %p30 = scmp.ne.s32.totalorder %s22, %s25
    %p31 = scmp.eq.s32.totalorder %s12, 0
    %p32 = por %p30, %p31
    %p33 = scmp.ne.s32.totalorder %s22, %s25
    %p34 = scmp.eq.s32.totalorder %s17, 1
    %p35 = por %p33, %p34
    %p36 = scmp.ne.s32.totalorder %s25, %s26
    %p37 = scmp.eq.s32.totalorder %s17, 0
    %p38 = por %p36, %p37
    %p39 = scmp.ne.s32.totalorder %s25, %s26
    %p40 = scmp.eq.s32.totalorder %s18, 1
    %p41 = por %p39, %p40
    %p43 = scmp.ne.s32.totalorder %s26, %s42
    %p44 = scmp.eq.s32.totalorder %s18, 0
    %p45 = por %p43, %p44
    %s47 = sadd.s32 %s46, 1
    %p50 = scmp.eq.s32.totalorder %s12, 1
    %p51 = scmp.ne.s32.totalorder %s46, %s48
    %p52 = scmp.eq.s32.totalorder %s12, 0
    %p53 = por %p51, %p52
    %p54 = scmp.ne.s32.totalorder %s46, %s48
    %p55 = scmp.eq.s32.totalorder %s17, 1
    %p56 = por %p54, %p55
    %p57 = scmp.ne.s32.totalorder %s48, %s49
    %p58 = scmp.eq.s32.totalorder %s17, 0
    %p59 = por %p57, %p58
    %p60 = scmp.ne.s32.totalorder %s48, %s49
    %p61 = scmp.eq.s32.totalorder %s18, 1
    %p62 = por %p60, %p61
    %p64 = scmp.ne.s32.totalorder %s49, %s63
    %p65 = scmp.eq.s32.totalorder %s18, 0
    %p66 = por %p64, %p65
    %s68 = sadd.s32 %s67, 1
    %p71 = scmp.eq.s32.totalorder %s12, 1
    %p72 = scmp.ne.s32.totalorder %s67, %s69
    %p73 = scmp.eq.s32.totalorder %s12, 0
    %p74 = por %p72, %p73
    %p75 = scmp.ne.s32.totalorder %s67, %s69
    %p76 = scmp.eq.s32.totalorder %s17, 1
    %p77 = por %p75, %p76
    %p78 = scmp.ne.s32.totalorder %s69, %s70
    %p79 = scmp.eq.s32.totalorder %s17, 0
    %p80 = por %p78, %p79
    %p81 = scmp.ne.s32.totalorder %s69, %s70
    %p82 = scmp.eq.s32.totalorder %s18, 1
    %p83 = por %p81, %p82
    %p85 = scmp.ne.s32.totalorder %s70, %s84
    %p86 = scmp.eq.s32.totalorder %s18, 0
    %p87 = por %p85, %p86
    %s89 = sadd.s32 %s88, 1
    %p92 = scmp.eq.s32.totalorder %s12, 1
    %p93 = scmp.ne.s32.totalorder %s88, %s90
    %p94 = scmp.eq.s32.totalorder %s12, 0
    %p95 = por %p93, %p94
    %p96 = scmp.ne.s32.totalorder %s88, %s90
    %p97 = scmp.eq.s32.totalorder %s17, 1
    %p98 = por %p96, %p97
    %p99 = scmp.ne.s32.totalorder %s90, %s91
    %p100 = scmp.eq.s32.totalorder %s17, 0
    %p101 = por %p99, %p100
    %p102 = scmp.ne.s32.totalorder %s90, %s91
    %p103 = scmp.eq.s32.totalorder %s18, 1
    %p104 = por %p102, %p103
    %p106 = scmp.ne.s32.totalorder %s91, %s105
    %p107 = scmp.eq.s32.totalorder %s18, 0
    %p108 = por %p106, %p107
    %s110 = sadd.s32 %s109, 1
    %p113 = scmp.eq.s32.totalorder %s12, 1
    %p114 = scmp.ne.s32.totalorder %s109, %s111
    %p115 = scmp.eq.s32.totalorder %s12, 0
    %p116 = por %p114, %p115
    %p117 = scmp.ne.s32.totalorder %s109, %s111
    %p118 = scmp.eq.s32.totalorder %s17, 1
    %p119 = por %p117, %p118
    %p120 = scmp.ne.s32.totalorder %s111, %s112
    %p121 = scmp.eq.s32.totalorder %s17, 0
    %p122 = por %p120, %p121
    %p123 = scmp.ne.s32.totalorder %s111, %s112
    %p124 = scmp.eq.s32.totalorder %s18, 1
    %p125 = por %p123, %p124
    %p127 = scmp.ne.s32.totalorder %s112, %s126
    %p128 = scmp.eq.s32.totalorder %s18, 0
    %p129 = por %p127, %p128
    %s131 = sadd.s32 %s130, 1
    %p134 = scmp.eq.s32.totalorder %s12, 1
    %p135 = scmp.ne.s32.totalorder %s130, %s132
    %p136 = scmp.eq.s32.totalorder %s12, 0
    %p137 = por %p135, %p136
    %p138 = scmp.ne.s32.totalorder %s130, %s132
    %p139 = scmp.eq.s32.totalorder %s17, 1
    %p140 = por %p138, %p139
    %p141 = scmp.ne.s32.totalorder %s132, %s133
    %p142 = scmp.eq.s32.totalorder %s17, 0
    %p143 = por %p141, %p142
    %p144 = scmp.ne.s32.totalorder %s132, %s133
    %p145 = scmp.eq.s32.totalorder %s18, 1
    %p146 = por %p144, %p145
    %p148 = scmp.ne.s32.totalorder %s133, %s147
    %p149 = scmp.eq.s32.totalorder %s18, 0
    %p150 = por %p148, %p149
    %s151 = ssub.s32 %s12, %s19
    %p152 = scmp.eq.s32.totalorder %s151, 0
    %s154 = sadd.s32 %s153, 1
    %s155 = scalar_select %p152, %s153, %s154
    %p158 = pneg %p152
    %p159 = scmp.eq.s32.totalorder %s12, 1
    %p160 = por %p158, %p159
    %p161 = scmp.ne.s32.totalorder %s153, %s156
    %p162 = scmp.eq.s32.totalorder %s12, 0
    %p163 = por %p161, %p162
    %p164 = scmp.ne.s32.totalorder %s153, %s156
    %p165 = scmp.eq.s32.totalorder %s17, 1
    %p166 = por %p164, %p165
    %p167 = scmp.ne.s32.totalorder %s156, %s157
    %p168 = scmp.eq.s32.totalorder %s17, 0
    %p169 = por %p167, %p168
    %p170 = scmp.ne.s32.totalorder %s156, %s157
    %p171 = scmp.eq.s32.totalorder %s18, 1
    %p172 = por %p170, %p171
    %p174 = scmp.ne.s32.totalorder %s157, %s173
    %p175 = scmp.eq.s32.totalorder %s18, 0
    %p176 = por %p174, %p175
    %p177 = scmp.le.s32.totalorder 1, %s12
    %p178 = scmp.lt.s32.totalorder %s12, 3
    %p179 = pnand %p177, %p178
    %p180 = pneg %p179
    // Predicated region
    $region9: #{simple_cnn_forward.2} parent=5 // pred_check
      _
    $region10: #{simple_cnn_forward.2} parent=5 // pred_check_branch
      %182 = sbr.rel (%p179) target = $region12
    $region11: #{simple_cnn_forward.2} parent=5 // pred_region
      %s183 = ssub.s32 %s12, 1
      // Predicated region
      $region13: #{simple_cnn_forward.2} parent=11 // pred_check
        %p184 = pneg %p59
      $region14: #{simple_cnn_forward.2} parent=11 // pred_check_branch
        %186 = sbr.rel (%p184) target = $region16
      $region15: #{simple_cnn_forward.2} parent=11 // pred_region
        _
      $region16: #{simple_cnn_forward.2} parent=11 // pred_fallthru
        _
      // Predicated region
      $region17: #{simple_cnn_forward.2} parent=11 // pred_check
        %p187 = pneg %p80
      $region18: #{simple_cnn_forward.2} parent=11 // pred_check_branch
        %189 = sbr.rel (%p187) target = $region20
      $region19: #{simple_cnn_forward.2} parent=11 // pred_region
        _
      $region20: #{simple_cnn_forward.2} parent=11 // pred_fallthru
        _
      // Predicated region
      $region21: #{simple_cnn_forward.2} parent=11 // pred_check
        %p190 = pneg %p101
      $region22: #{simple_cnn_forward.2} parent=11 // pred_check_branch
        %192 = sbr.rel (%p190) target = $region24
      $region23: #{simple_cnn_forward.2} parent=11 // pred_region
        _
      $region24: #{simple_cnn_forward.2} parent=11 // pred_fallthru
        _
      // Predicated region
      $region25: #{simple_cnn_forward.2} parent=11 // pred_check
        %p193 = pneg %p122
      $region26: #{simple_cnn_forward.2} parent=11 // pred_check_branch
        %195 = sbr.rel (%p193) target = $region28
      $region27: #{simple_cnn_forward.2} parent=11 // pred_region
        _
      $region28: #{simple_cnn_forward.2} parent=11 // pred_fallthru
        _
      // Predicated region
      $region29: #{simple_cnn_forward.2} parent=11 // pred_check
        %p196 = pneg %p143
      $region30: #{simple_cnn_forward.2} parent=11 // pred_check_branch
        %198 = sbr.rel (%p196) target = $region32
      $region31: #{simple_cnn_forward.2} parent=11 // pred_region
        _
      $region32: #{simple_cnn_forward.2} parent=11 // pred_fallthru
        _
    $region12: #{simple_cnn_forward.2} parent=5 // pred_fallthru
      _
    %p199 = scmp.lt.s32.totalorder %s12, 2
    // Predicated region
    $region33: #{simple_cnn_forward.2} parent=5 // pred_check
      %p200 = pneg %p199
    $region34: #{simple_cnn_forward.2} parent=5 // pred_check_branch
      %202 = sbr.rel (%p200) target = $region36
    $region35: #{simple_cnn_forward.2} parent=5 // pred_region
      // Predicated region
      $region37: #{simple_cnn_forward.2} parent=35 // pred_check
        %p203 = pneg %p32
      $region38: #{simple_cnn_forward.2} parent=35 // pred_check_branch
        %205 = sbr.rel (%p203) target = $region40
      $region39: #{simple_cnn_forward.2} parent=35 // pred_region
        %p206 = scmp.lt.s32.totalorder %s12, 1
        %s207 = scalar_select %p206, %s12, 1
        %s208 = smul.addr %s207, 32
        %s209 = smul.addr %s208, 4
        %s210 = scalar_lea.vmem %s0, %s209
      $region40: #{simple_cnn_forward.2} parent=35 // pred_fallthru
        _
    $region36: #{simple_cnn_forward.2} parent=5 // pred_fallthru
      _
    %p211 = scmp.le.s32.totalorder 1, %s12
    %p212 = scmp.lt.s32.totalorder %s12, 3
    %p213 = pnand %p211, %p212
    %p214 = pneg %p213
    // Predicated region
    $region41: #{simple_cnn_forward.2} parent=5 // pred_check
      _
    $region42: #{simple_cnn_forward.2} parent=5 // pred_check_branch
      %216 = sbr.rel (%p213) target = $region44
    $region43: #{simple_cnn_forward.2} parent=5 // pred_region
      %s217 = ssub.s32 %s12, 1
      %p218 = scmp.lt.s32.totalorder %s17, 1
      %s219 = scalar_select %p218, %s17, 1
      %s220 = smul.addr %s219, 32
      %s221 = smul.addr %s220, 4
      %s222 = scalar_lea.vmem %s0, %s221
      %p223 = pneg %p38
      %p224 = pneg %p35
      %p225 = pneg %p59
      %p226 = pneg %p56
      %p227 = pneg %p80
      %p228 = pneg %p77
      %p229 = pneg %p101
      %p230 = pneg %p98
      %p231 = pneg %p122
      %p232 = pneg %p119
      %p233 = pneg %p143
      %p234 = pneg %p140
      %p235 = pneg %p169
      %p236 = pneg %p166
      %p237 = scmp.lt.s32.totalorder %s17, 1
      %s238 = scalar_select %p237, %s17, 1
      %s239 = smul.addr %s238, 4
      %s240 = smul.addr %s239, 4
      %s241 = scalar_lea.vmem %s6, %s240
      %p242 = scmp.lt.s32.totalorder %s17, 1
      %s243 = scalar_select %p242, %s17, 1
      %s244 = smul.addr %s243, 32
      %s245 = smul.addr %s244, 4
      %s246 = scalar_lea.vmem %s0, %s245
      %p247 = scmp.lt.s32.totalorder %s17, 1
      %s248 = scalar_select %p247, %s17, 1
      %s249 = smul.addr %s248, 4
      %s250 = smul.addr %s249, 4
      %s251 = scalar_lea.vmem %s6, %s250
      %v255 = vld [vmem:[%s1] sm:$0xf]
      %v256 = vld [vmem:[%s1 + $0x4] sm:$0xf]
      %v257 = vld [vmem:[%s246] sm:$0xff]
      %v258 = vld [vmem:[%s246 + $0x8] sm:$0xff]
      %v259 = vld [vmem:[%s246 + $0x10] sm:$0xff]
      %v260 = vld [vmem:[%s246 + $0x18] sm:$0xff]
      %v261 = vld [vmem:[%s246 + $0x20] sm:$0xff]
      %v262 = vld [vmem:[%s246 + $0x28] sm:$0xff]
      %v263 = vld [vmem:[%s246 + $0x30] sm:$0xff]
      %v264 = vld [vmem:[%s246 + $0x38] sm:$0xff]
      %v265 = vld [vmem:[%s246 + $0x40] sm:$0xff]
      %v266 = vld [vmem:[%s246 + $0x48] sm:$0xff]
      %v267 = vld [vmem:[%s246 + $0x50] sm:$0xff]
      %v268 = vld [vmem:[%s246 + $0x58] sm:$0xff]
      %v269 = vld [vmem:[%s246 + $0x60] sm:$0x33]
      %v270 = vld [vmem:[%s246 + $0x68] sm:$0x33]
      %v271 = vld [vmem:[%s246 + $0x70] sm:$0x33]
      %v272 = vld [vmem:[%s246 + $0x78] sm:$0x33]
      %v273 = vld [vmem:[%s2] sm:$0xff]
      %v274 = vld [vmem:[%s2 + $0x8] sm:$0xff]
      %276 = vset.pattern.permute.xlu0 0
      %277 = vperm.xlu0 %276, %v273
      %v278 = vpop.permute.xlu0 %277
      %281 = vset.pattern.permute.xlu0 0
      %282 = vperm.xlu0 %281, %v274
      %v283 = vpop.permute.xlu0 %282
      %v287 = vunpack.c.l.b16 %v255
      %v288 = vunpack.c.l.b16 %v256
      %v289 = vpack.c.b16 %v288, %v287
      %v306 = vunpack.c.l.b16 %v257
      %v307 = vunpack.c.h.b16 %v257
      %v308 = vunpack.c.l.b16 %v258
      %v309 = vunpack.c.h.b16 %v258
      %v310 = vunpack.c.l.b16 %v259
      %v311 = vunpack.c.h.b16 %v259
      %v312 = vunpack.c.l.b16 %v260
      %v313 = vunpack.c.h.b16 %v260
      %v314 = vunpack.c.l.b16 %v261
      %v315 = vunpack.c.h.b16 %v261
      %v316 = vunpack.c.l.b16 %v262
      %v317 = vunpack.c.h.b16 %v262
      %v318 = vunpack.c.l.b16 %v263
      %v319 = vunpack.c.h.b16 %v263
      %v320 = vunpack.c.l.b16 %v264
      %v321 = vunpack.c.h.b16 %v264
      %v322 = vunpack.c.l.b16 %v265
      %v323 = vunpack.c.h.b16 %v265
      %v324 = vunpack.c.l.b16 %v266
      %v325 = vunpack.c.h.b16 %v266
      %v326 = vunpack.c.l.b16 %v267
      %v327 = vunpack.c.h.b16 %v267
      %v328 = vunpack.c.l.b16 %v268
      %v329 = vunpack.c.h.b16 %v268
      %v330 = vunpack.c.l.b16 %v269
      %v331 = vunpack.c.h.b16 %v269
      %v332 = vunpack.c.l.b16 %v270
      %v333 = vunpack.c.h.b16 %v270
      %v334 = vunpack.c.l.b16 %v271
      %v335 = vunpack.c.h.b16 %v271
      %v336 = vunpack.c.l.b16 %v272
      %v337 = vunpack.c.h.b16 %v272
      %v338 = vpack.c.b16 %v314, %v306
      %v339 = vpack.c.b16 %v315, %v307
      %v340 = vpack.c.b16 %v316, %v308
      %v341 = vpack.c.b16 %v317, %v309
      %v342 = vpack.c.b16 %v318, %v310
      %v343 = vpack.c.b16 %v319, %v311
      %v344 = vpack.c.b16 %v320, %v312
      %v345 = vpack.c.b16 %v321, %v313
      %v346 = vpack.c.b16 %v330, %v322
      %v347 = vpack.c.b16 %v331, %v323
      %v348 = vpack.c.b16 %v332, %v324
      %v349 = vpack.c.b16 %v333, %v325
      %v350 = vpack.c.b16 %v334, %v326
      %v351 = vpack.c.b16 %v335, %v327
      %v352 = vpack.c.b16 %v336, %v328
      %v353 = vpack.c.b16 %v337, %v329
      %vm362 = vcmask 220160
      %v364 = vsel %vm362, %v289, 0
      %vm366 = vcmask 1044480
      %vm367 = vcmask 1045504
      %v368 = vsel %vm366, 4294967295, 65535
      %v369 = vsel %vm367, %v368, 0
      %v371 = vand.u32 %v346, %v369
      %v374 = vand.u32 %v347, %v369
      %v377 = vand.u32 %v348, %v369
      %v380 = vand.u32 %v349, %v369
      %v383 = vand.u32 %v350, %v369
      %v386 = vand.u32 %v351, %v369
      %v389 = vand.u32 %v352, %v369
      %v392 = vand.u32 %v353, %v369
      %394 = vmatprep.subr.bf16.mxu0 %v339
      %395 = vmatpush1.bf16.msra.mxu0 %v338
      %396 = vmatprep.subr.bf16.mxu0 %v374
      %397 = vmatpush1.bf16.msra.mxu0 %v371
      %398 = vmatprep.subr.bf16.mxu0 0
      %399 = vmatpush1.bf16.msra.mxu0 0
      %400 = vmatprep.subr.bf16.mxu0 0
      %401 = vmatpush1.bf16.msra.mxu0 0
      %402 = vmatprep.subr.bf16.mxu0 0
      %403 = vmatpush1.bf16.msra.mxu0 0
      %404 = vmatprep.subr.bf16.mxu0 0
      %405 = vmatpush1.bf16.msra.mxu0 0
      %406 = vmatprep.subr.bf16.mxu0 0
      %407 = vmatpush1.bf16.msra.mxu0 0
      %408 = vmatprep.subr.bf16.mxu0 0
      %409 = vmatpush1.bf16.msra.mxu0 0
      %410 = vmatprep.subr.bf16.mxu0 0
      %411 = vmatpush1.bf16.msra.mxu0 0
      %412 = vmatprep.subr.bf16.mxu0 0
      %413 = vmatpush1.bf16.msra.mxu0 0
      %414 = vmatprep.subr.bf16.mxu0 0
      %415 = vmatpush1.bf16.msra.mxu0 0
      %416 = vmatprep.subr.bf16.mxu0 0
      %417 = vmatpush1.bf16.msra.mxu0 0
      %418 = vmatprep.subr.bf16.mxu0 0
      %419 = vmatpush1.bf16.msra.mxu0 0
      %420 = vmatprep.subr.bf16.mxu0 0
      %421 = vmatpush1.bf16.msra.mxu0 0
      %422 = vmatprep.subr.bf16.mxu0 0
      %423 = vmatpush1.bf16.msra.mxu0 0
      %424 = vmatprep.subr.bf16.mxu0 0
      %425 = vmatpush1.bf16.msra.mxu0 0
      %426 = vmatprep.mubr.bf16.mxu0 0
      %427 = vmatmul.mubr.bf16.gmra.mrb[0].mxu0 %v364
      %v428 = vpop.f32.mrb[0].mxu0
      %v429 = vadd.f32 %v278, %v428
      %v430 = vpop.f32.mrb[0].mxu0
      %v431 = vadd.f32 %v278, %v430
      %v432 = vpop.f32.mrb[0].mxu0
      %v433 = vadd.f32 %v283, %v432
      %v434 = vpop.f32.mrb[0].mxu0
      %v435 = vadd.f32 %v283, %v434
      %436 = vdwg.mxu0
      %437 = vmatprep.subr.bf16.mxu0 %v341
      %438 = vmatpush1.bf16.msra.mxu0 %v340
      %439 = vmatprep.subr.bf16.mxu0 %v380
      %440 = vmatpush1.bf16.msra.mxu0 %v377
      %441 = vmatprep.subr.bf16.mxu0 0
      %442 = vmatpush1.bf16.msra.mxu0 0
      %443 = vmatprep.subr.bf16.mxu0 0
      %444 = vmatpush1.bf16.msra.mxu0 0
      %445 = vmatprep.subr.bf16.mxu0 0
      %446 = vmatpush1.bf16.msra.mxu0 0
      %447 = vmatprep.subr.bf16.mxu0 0
      %448 = vmatpush1.bf16.msra.mxu0 0
      %449 = vmatprep.subr.bf16.mxu0 0
      %450 = vmatpush1.bf16.msra.mxu0 0
      %451 = vmatprep.subr.bf16.mxu0 0
      %452 = vmatpush1.bf16.msra.mxu0 0
      %453 = vmatprep.subr.bf16.mxu0 0
      %454 = vmatpush1.bf16.msra.mxu0 0
      %455 = vmatprep.subr.bf16.mxu0 0
      %456 = vmatpush1.bf16.msra.mxu0 0
      %457 = vmatprep.subr.bf16.mxu0 0
      %458 = vmatpush1.bf16.msra.mxu0 0
      %459 = vmatprep.subr.bf16.mxu0 0
      %460 = vmatpush1.bf16.msra.mxu0 0
      %461 = vmatprep.subr.bf16.mxu0 0
      %462 = vmatpush1.bf16.msra.mxu0 0
      %463 = vmatprep.subr.bf16.mxu0 0
      %464 = vmatpush1.bf16.msra.mxu0 0
      %465 = vmatprep.subr.bf16.mxu0 0
      %466 = vmatpush1.bf16.msra.mxu0 0
      %467 = vmatprep.subr.bf16.mxu0 0
      %468 = vmatpush1.bf16.msra.mxu0 0
      %469 = vmatprep.mubr.bf16.mxu0 0
      %470 = vmatmul.mubr.bf16.gmra.mrb[0].mxu0 %v364
      %v471 = vpop.f32.mrb[0].mxu0
      %v472 = vadd.f32 %v278, %v471
      %v473 = vpop.f32.mrb[0].mxu0
      %v474 = vadd.f32 %v278, %v473
      %v475 = vpop.f32.mrb[0].mxu0
      %v476 = vadd.f32 %v283, %v475
      %v477 = vpop.f32.mrb[0].mxu0
      %v478 = vadd.f32 %v283, %v477
      %479 = vdwg.mxu0
      %480 = vmatprep.subr.bf16.mxu0 %v343
      %481 = vmatpush1.bf16.msra.mxu0 %v342
      %482 = vmatprep.subr.bf16.mxu0 %v386
      %483 = vmatpush1.bf16.msra.mxu0 %v383
      %484 = vmatprep.subr.bf16.mxu0 0
      %485 = vmatpush1.bf16.msra.mxu0 0
      %486 = vmatprep.subr.bf16.mxu0 0
      %487 = vmatpush1.bf16.msra.mxu0 0
      %488 = vmatprep.subr.bf16.mxu0 0
      %489 = vmatpush1.bf16.msra.mxu0 0
      %490 = vmatprep.subr.bf16.mxu0 0
      %491 = vmatpush1.bf16.msra.mxu0 0
      %492 = vmatprep.subr.bf16.mxu0 0
      %493 = vmatpush1.bf16.msra.mxu0 0
      %494 = vmatprep.subr.bf16.mxu0 0
      %495 = vmatpush1.bf16.msra.mxu0 0
      %496 = vmatprep.subr.bf16.mxu0 0
      %497 = vmatpush1.bf16.msra.mxu0 0
      %498 = vmatprep.subr.bf16.mxu0 0
      %499 = vmatpush1.bf16.msra.mxu0 0
      %500 = vmatprep.subr.bf16.mxu0 0
      %501 = vmatpush1.bf16.msra.mxu0 0
      %502 = vmatprep.subr.bf16.mxu0 0
      %503 = vmatpush1.bf16.msra.mxu0 0
      %504 = vmatprep.subr.bf16.mxu0 0
      %505 = vmatpush1.bf16.msra.mxu0 0
      %506 = vmatprep.subr.bf16.mxu0 0
      %507 = vmatpush1.bf16.msra.mxu0 0
      %508 = vmatprep.subr.bf16.mxu0 0
      %509 = vmatpush1.bf16.msra.mxu0 0
      %510 = vmatprep.subr.bf16.mxu0 0
      %511 = vmatpush1.bf16.msra.mxu0 0
      %512 = vmatprep.mubr.bf16.mxu0 0
      %513 = vmatmul.mubr.bf16.gmra.mrb[0].mxu0 %v364
      %v514 = vpop.f32.mrb[0].mxu0
      %v515 = vadd.f32 %v278, %v514
      %v516 = vpop.f32.mrb[0].mxu0
      %v517 = vadd.f32 %v278, %v516
      %v518 = vpop.f32.mrb[0].mxu0
      %v519 = vadd.f32 %v283, %v518
      %v520 = vpop.f32.mrb[0].mxu0
      %v521 = vadd.f32 %v283, %v520
      %522 = vdwg.mxu0
      %523 = vmatprep.subr.bf16.mxu0 %v345
      %524 = vmatpush1.bf16.msra.mxu0 %v344
      %525 = vmatprep.subr.bf16.mxu0 %v392
      %526 = vmatpush1.bf16.msra.mxu0 %v389
      %527 = vmatprep.subr.bf16.mxu0 0
      %528 = vmatpush1.bf16.msra.mxu0 0
      %529 = vmatprep.subr.bf16.mxu0 0
      %530 = vmatpush1.bf16.msra.mxu0 0
      %531 = vmatprep.subr.bf16.mxu0 0
      %532 = vmatpush1.bf16.msra.mxu0 0
      %533 = vmatprep.subr.bf16.mxu0 0
      %534 = vmatpush1.bf16.msra.mxu0 0
      %535 = vmatprep.subr.bf16.mxu0 0
      %536 = vmatpush1.bf16.msra.mxu0 0
      %537 = vmatprep.subr.bf16.mxu0 0
      %538 = vmatpush1.bf16.msra.mxu0 0
      %539 = vmatprep.subr.bf16.mxu0 0
      %540 = vmatpush1.bf16.msra.mxu0 0
      %541 = vmatprep.subr.bf16.mxu0 0
      %542 = vmatpush1.bf16.msra.mxu0 0
      %543 = vmatprep.subr.bf16.mxu0 0
      %544 = vmatpush1.bf16.msra.mxu0 0
      %545 = vmatprep.subr.bf16.mxu0 0
      %546 = vmatpush1.bf16.msra.mxu0 0
      %547 = vmatprep.subr.bf16.mxu0 0
      %548 = vmatpush1.bf16.msra.mxu0 0
      %549 = vmatprep.subr.bf16.mxu0 0
      %550 = vmatpush1.bf16.msra.mxu0 0
      %551 = vmatprep.subr.bf16.mxu0 0
      %552 = vmatpush1.bf16.msra.mxu0 0
      %553 = vmatprep.subr.bf16.mxu0 0
      %554 = vmatpush1.bf16.msra.mxu0 0
      %555 = vmatprep.mubr.bf16.mxu0 0
      %556 = vmatmul.mubr.bf16.gmra.mrb[0].mxu0 %v364
      %v557 = vpop.f32.mrb[0].mxu0
      %v558 = vadd.f32 %v278, %v557
      %v559 = vpop.f32.mrb[0].mxu0
      %v560 = vadd.f32 %v278, %v559
      %v561 = vpop.f32.mrb[0].mxu0
      %v562 = vadd.f32 %v283, %v561
      %v563 = vpop.f32.mrb[0].mxu0
      %v564 = vadd.f32 %v283, %v563
      %565 = vdwg.mxu0
      %v566 = vmax.f32 %v429, 0.0
      %v567 = vmax.f32 %v431, 0.0
      %v568 = vmax.f32 %v472, 0.0
      %v569 = vmax.f32 %v474, 0.0
      %v570 = vmax.f32 %v515, 0.0
      %v571 = vmax.f32 %v517, 0.0
      %v572 = vmax.f32 %v558, 0.0
      %v573 = vmax.f32 %v560, 0.0
      %v574 = vmax.f32 %v433, 0.0
      %v575 = vmax.f32 %v435, 0.0
      %v576 = vmax.f32 %v476, 0.0
      %v577 = vmax.f32 %v478, 0.0
      %v578 = vmax.f32 %v519, 0.0
      %v579 = vmax.f32 %v521, 0.0
      %v580 = vmax.f32 %v562, 0.0
      %v581 = vmax.f32 %v564, 0.0
      %v582 = vmax.f32 %v566, %v570
      %v583 = vmax.f32 %v567, %v571
      %v584 = vmax.f32 %v568, %v572
      %v585 = vmax.f32 %v569, %v573
      %v586 = vmax.f32 %v574, %v578
      %v587 = vmax.f32 %v575, %v579
      %v588 = vmax.f32 %v576, %v580
      %v589 = vmax.f32 %v577, %v581
      %v590 = vmax.f32 %v582, %v584
      %v591 = vmax.f32 %v583, %v585
      %v592 = vmax.f32 %v586, %v588
      %v593 = vmax.f32 %v587, %v589
      %v594 = vpack.c.bf16 %v592, %v590
      %v595 = vpack.c.bf16 %v593, %v591
      %598 = vrot.lane.b32.xlu0 %v594, 17
      %v599 = vpop.permute.xlu0 %598
      %600 = vrot.lane.b32.xlu0 %v595, 17
      %v601 = vpop.permute.xlu0 %600
      %vm602 = vcmask 138240
      %v603 = vsel %vm602, %v599, %v601
      %vm605 = vcmask 138240
      %v608 = vsel %vm605, 0, %v599
      %v611 = vsel %vm605, %v601, 0
      %v613 = vlaneseq
      %v614 = vand.u32 %v613, 127
      %v615 = vadd.s32 %v614, 128
      %vm616 = vcmp.lt.s32.totalorder %v614, 0
      %v617 = vsub.s32 0, %v614
      %v618 = vsel %vm616, %v617, %v614
      %v619 = vshrl.u32 %v618, 4
      %v620 = vand.u32 %v618, 15
      %v621 = vsub.s32 0, %v620
      %v622 = vsel %vm616, %v621, %v620
      %vm623 = vcmp.lt.s32.totalorder %v615, 0
      %v624 = vsub.s32 0, %v615
      %v625 = vsel %vm623, %v624, %v615
      %v626 = vshrl.u32 %v625, 4
      %v627 = vand.u32 %v625, 15
      %v628 = vsub.s32 0, %v627
      %v629 = vsel %vm623, %v628, %v627
      %vm630 = vcmp.ne.s32.totalorder %v622, 0
      %vm631 = vcmp.ne.s32.totalorder %v629, 0
      %vm632 = vcmp.lt.s32.totalorder %v622, 0
      %vm633 = vcmp.lt.s32.totalorder %v629, 0
      %vm634 = vmand %vm632, %vm630
      %vm635 = vmand %vm633, %vm631
      %v636 = vadd.s32 %v622, 16
      %v637 = vadd.s32 %v629, 16
      %v638 = vsel %vm634, %v636, %v622
      %v639 = vsel %vm635, %v637, %v629
      %vm640 = vcmp.gt.s32.totalorder %v638, 0
      %vm641 = vcmp.gt.s32.totalorder %v639, 0
      %vm642 = vmpackc.low %vm641, %vm640
      %v643 = vsel %vm642, 65537, 0
      %v644 = vlaneseq
      %v645 = vshrl.u32 %v644, 7
      %v646 = vsub.s32 0, %v645
      %v647 = vrot.slane %v643, %v646
      %v648 = vlaneseq
      %v649 = vshrl.u32 %v648, 7
      %v650 = vsub.s32 4, %v649
      %v651 = vrot.slane %v643, %v650
      %vm652 = vcmp.ne.s16.totalorder %v647, 0
      %vm653 = vcmp.ne.s16.totalorder %v651, 0
      %v654 = vsel %vm652, %v608, 0
      %v655 = vsel %vm653, %v603, 0
      %vm656 = vcmp.lt.s32.totalorder %v638, 15
      %vm657 = vcmp.lt.s32.totalorder %v639, 15
      %vm658 = vmpackc.low %vm657, %vm656
      %v659 = vsel %vm658, 65537, 0
      %v660 = vlaneseq
      %v661 = vshrl.u32 %v660, 7
      %v662 = vsub.s32 0, %v661
      %v663 = vrot.slane %v659, %v662
      %v664 = vlaneseq
      %v665 = vshrl.u32 %v664, 7
      %v666 = vsub.s32 4, %v665
      %v667 = vrot.slane %v659, %v666
      %668 = vrot.lane.b32.xlu0 %v663, 2
      %v669 = vpop.permute.xlu0 %668
      %670 = vrot.lane.b32.xlu0 %v667, 2
      %v671 = vpop.permute.xlu0 %670
      %vm672 = vcmask 15360
      %v673 = vsel %vm672, %v669, %v671
      %vm674 = vcmp.ne.s16.totalorder %v669, 0
      %vm675 = vcmp.ne.s16.totalorder %v673, 0
      %vm676 = vcmp.ne.s16.totalorder %v671, 0
      %v677 = vsel %vm674, %v608, 0
      %v678 = vsel %vm675, %v603, 0
      %v679 = vsel %vm676, %v611, 0
      %680 = vrot.lane.b32.xlu0 %v647, 16
      %v681 = vpop.permute.xlu0 %680
      %682 = vrot.lane.b32.xlu0 %v651, 16
      %v683 = vpop.permute.xlu0 %682
      %vm684 = vcmask 130048
      %v685 = vsel %vm684, %v681, %v683
      %vm686 = vcmp.ne.s16.totalorder %v681, 0
      %vm687 = vcmp.ne.s16.totalorder %v685, 0
      %vm688 = vcmp.ne.s16.totalorder %v683, 0
      %v689 = vsel %vm686, %v608, 0
      %v690 = vsel %vm687, %v603, 0
      %v691 = vsel %vm688, %v611, 0
      %692 = vrot.lane.b32.xlu0 %v663, 18
      %v693 = vpop.permute.xlu0 %692
      %694 = vrot.lane.b32.xlu0 %v667, 18
      %v695 = vpop.permute.xlu0 %694
      %vm696 = vcmask 146432
      %v697 = vsel %vm696, %v693, %v695
      %vm698 = vcmp.ne.s16.totalorder %v693, 0
      %vm699 = vcmp.ne.s16.totalorder %v697, 0
      %vm700 = vcmp.ne.s16.totalorder %v695, 0
      %v701 = vsel %vm698, %v608, 0
      %v702 = vsel %vm699, %v603, 0
      %v703 = vsel %vm700, %v611, 0
      %704 = vrot.lane.b32.xlu0 %v647, 32
      %v705 = vpop.permute.xlu0 %704
      %706 = vrot.lane.b32.xlu0 %v651, 32
      %v707 = vpop.permute.xlu0 %706
      %vm708 = vcmask 261120
      %v709 = vsel %vm708, %v705, %v707
      %vm710 = vcmp.ne.s16.totalorder %v705, 0
      %vm711 = vcmp.ne.s16.totalorder %v709, 0
      %vm712 = vcmp.ne.s16.totalorder %v707, 0
      %v713 = vsel %vm710, %v608, 0
      %v714 = vsel %vm711, %v603, 0
      %v715 = vsel %vm712, %v611, 0
      %716 = vrot.lane.b32.xlu0 %v663, 34
      %v717 = vpop.permute.xlu0 %716
      %718 = vrot.lane.b32.xlu0 %v667, 34
      %v719 = vpop.permute.xlu0 %718
      %vm720 = vcmask 277504
      %v721 = vsel %vm720, %v717, %v719
      %vm722 = vcmp.ne.s16.totalorder %v717, 0
      %vm723 = vcmp.ne.s16.totalorder %v721, 0
      %vm724 = vcmp.ne.s16.totalorder %v719, 0
      %v725 = vsel %vm722, %v608, 0
      %v726 = vsel %vm723, %v603, 0
      %v727 = vsel %vm724, %v611, 0
      %730 = vrot.lane.b32.xlu0 %v608, 127
      %v731 = vpop.permute.xlu0 %730
      %732 = vrot.lane.b32.xlu0 %v603, 127
      %v733 = vpop.permute.xlu0 %732
      %734 = vrot.lane.b32.xlu0 %v611, 127
      %v735 = vpop.permute.xlu0 %734
      %vm736 = vcmask 1039360
      %v737 = vsel %vm736, %v731, %v733
      %v738 = vsel %vm736, %v733, %v735
      %744 = vrot.lane.b32.xlu0 %v677, 126
      %v745 = vpop.permute.xlu0 %744
      %746 = vrot.lane.b32.xlu0 %v678, 126
      %v747 = vpop.permute.xlu0 %746
      %748 = vrot.lane.b32.xlu0 %v679, 126
      %v749 = vpop.permute.xlu0 %748
      %vm750 = vcmask 1031168
      %v751 = vsel %vm750, %v745, %v747
      %v752 = vsel %vm750, %v747, %v749
      %758 = vrot.lane.b32.xlu0 %v689, 112
      %v759 = vpop.permute.xlu0 %758
      %760 = vrot.lane.b32.xlu0 %v690, 112
      %v761 = vpop.permute.xlu0 %760
      %762 = vrot.lane.b32.xlu0 %v691, 112
      %v763 = vpop.permute.xlu0 %762
      %vm764 = vcmask 916480
      %v765 = vsel %vm764, %v759, %v761
      %v766 = vsel %vm764, %v761, %v763
      %769 = vrot.lane.b32.xlu0 %v608, 111
      %v770 = vpop.permute.xlu0 %769
      %771 = vrot.lane.b32.xlu0 %v603, 111
      %v772 = vpop.permute.xlu0 %771
      %773 = vrot.lane.b32.xlu0 %v611, 111
      %v774 = vpop.permute.xlu0 %773
      %vm775 = vcmask 908288
      %v776 = vsel %vm775, %v770, %v772
      %v777 = vsel %vm775, %v772, %v774
      %783 = vrot.lane.b32.xlu0 %v701, 110
      %v784 = vpop.permute.xlu0 %783
      %785 = vrot.lane.b32.xlu0 %v702, 110
      %v786 = vpop.permute.xlu0 %785
      %787 = vrot.lane.b32.xlu0 %v703, 110
      %v788 = vpop.permute.xlu0 %787
      %vm789 = vcmask 900096
      %v790 = vsel %vm789, %v784, %v786
      %v791 = vsel %vm789, %v786, %v788
      %797 = vrot.lane.b32.xlu0 %v713, 96
      %v798 = vpop.permute.xlu0 %797
      %799 = vrot.lane.b32.xlu0 %v714, 96
      %v800 = vpop.permute.xlu0 %799
      %801 = vrot.lane.b32.xlu0 %v715, 96
      %v802 = vpop.permute.xlu0 %801
      %vm803 = vcmask 785408
      %v804 = vsel %vm803, %v798, %v800
      %v805 = vsel %vm803, %v800, %v802
      %808 = vrot.lane.b32.xlu0 %v608, 95
      %v809 = vpop.permute.xlu0 %808
      %810 = vrot.lane.b32.xlu0 %v603, 95
      %v811 = vpop.permute.xlu0 %810
      %812 = vrot.lane.b32.xlu0 %v611, 95
      %v813 = vpop.permute.xlu0 %812
      %vm814 = vcmask 777216
      %v815 = vsel %vm814, %v809, %v811
      %v816 = vsel %vm814, %v811, %v813
      %822 = vrot.lane.b32.xlu0 %v725, 94
      %v823 = vpop.permute.xlu0 %822
      %824 = vrot.lane.b32.xlu0 %v726, 94
      %v825 = vpop.permute.xlu0 %824
      %826 = vrot.lane.b32.xlu0 %v727, 94
      %v827 = vpop.permute.xlu0 %826
      %vm828 = vcmask 769024
      %v829 = vsel %vm828, %v823, %v825
      %v830 = vsel %vm828, %v825, %v827
      %v833 = vld [vmem:[%s3] sm:$0xff]
      %v834 = vld [vmem:[%s3 + $0x8] sm:$0xff]
      %v835 = vld [vmem:[%s3 + $0x10] sm:$0xff]
      %v836 = vld [vmem:[%s3 + $0x18] sm:$0xff]
      %v837 = vld [vmem:[%s4] sm:$0xff]
      %v838 = vld [vmem:[%s4 + $0x8] sm:$0xff]
      %v839 = vld [vmem:[%s4 + $0x10] sm:$0xff]
      %v840 = vld [vmem:[%s4 + $0x18] sm:$0xff]
      %842 = vset.pattern.permute.xlu0 0
      %843 = vperm.xlu0 %842, %v837
      %v844 = vpop.permute.xlu0 %843
      %847 = vset.pattern.permute.xlu0 0
      %848 = vperm.xlu0 %847, %v838
      %v849 = vpop.permute.xlu0 %848
      %852 = vset.pattern.permute.xlu0 0
      %853 = vperm.xlu0 %852, %v839
      %v854 = vpop.permute.xlu0 %853
      %857 = vset.pattern.permute.xlu0 0
      %858 = vperm.xlu0 %857, %v840
      %v859 = vpop.permute.xlu0 %858
      %v865 = vunpack.c.l.b16 %v833
      %v866 = vunpack.c.h.b16 %v833
      %v867 = vunpack.c.l.b16 %v834
      %v868 = vunpack.c.h.b16 %v834
      %v869 = vunpack.c.l.b16 %v835
      %v870 = vunpack.c.h.b16 %v835
      %v871 = vunpack.c.l.b16 %v836
      %v872 = vunpack.c.h.b16 %v836
      %v873 = vpack.c.b16 %v867, %v865
      %v874 = vpack.c.b16 %v868, %v866
      %v875 = vpack.c.b16 %v871, %v869
      %v876 = vpack.c.b16 %v872, %v870
      %vm879 = vcmask 130048
      %v881 = vsel %vm879, %v874, 0
      %v884 = vsel %vm879, %v876, 0
      %886 = vmatprep.subr.bf16.mxu0 %v655
      %887 = vmatpush1.bf16.msra.mxu0 %v654
      %888 = vmatprep.subr.bf16.mxu0 %v738
      %889 = vmatpush1.bf16.msra.mxu0 %v737
      %890 = vmatprep.subr.bf16.mxu0 %v752
      %891 = vmatpush1.bf16.msra.mxu0 %v751
      %892 = vmatprep.subr.bf16.mxu0 %v766
      %893 = vmatpush1.bf16.msra.mxu0 %v765
      %894 = vmatprep.subr.bf16.mxu0 %v777
      %895 = vmatpush1.bf16.msra.mxu0 %v776
      %896 = vmatprep.subr.bf16.mxu0 %v791
      %897 = vmatpush1.bf16.msra.mxu0 %v790
      %898 = vmatprep.subr.bf16.mxu0 %v805
      %899 = vmatpush1.bf16.msra.mxu0 %v804
      %900 = vmatprep.subr.bf16.mxu0 %v816
      %901 = vmatpush1.bf16.msra.mxu0 %v815
      %902 = vmatprep.subr.bf16.mxu0 %v830
      %903 = vmatpush1.bf16.msra.mxu0 %v829
      %904 = vmatprep.subr.bf16.mxu0 0
      %905 = vmatpush1.bf16.msra.mxu0 0
      %906 = vmatprep.subr.bf16.mxu0 0
      %907 = vmatpush1.bf16.msra.mxu0 0
      %908 = vmatprep.subr.bf16.mxu0 0
      %909 = vmatpush1.bf16.msra.mxu0 0
      %910 = vmatprep.subr.bf16.mxu0 0
      %911 = vmatpush1.bf16.msra.mxu0 0
      %912 = vmatprep.subr.bf16.mxu0 0
      %913 = vmatpush1.bf16.msra.mxu0 0
      %914 = vmatprep.subr.bf16.mxu0 0
      %915 = vmatpush1.bf16.msra.mxu0 0
      %916 = vmatprep.subr.bf16.mxu0 0
      %917 = vmatpush1.bf16.msra.mxu0 0
      %918 = vmatprep.mubr.bf16.mxu0 %v881
      %919 = vmatmul.mubr.bf16.gmra.mrb[0].mxu0 %v873
      %v920 = vpop.f32.mrb[0].mxu0
      %v921 = vadd.f32 %v844, %v920
      %v922 = vpop.f32.mrb[0].mxu0
      %v923 = vadd.f32 %v844, %v922
      %v924 = vpop.f32.mrb[0].mxu0
      %v925 = vadd.f32 %v849, %v924
      %v926 = vpop.f32.mrb[0].mxu0
      %v927 = vadd.f32 %v849, %v926
      %928 = vmatprep.mubr.bf16.mxu0 %v884
      %929 = vmatmul.mubr.bf16.gmra.mrb[0].mxu0 %v875
      %v930 = vpop.f32.mrb[0].mxu0
      %v931 = vadd.f32 %v854, %v930
      %v932 = vpop.f32.mrb[0].mxu0
      %v933 = vadd.f32 %v854, %v932
      %v934 = vpop.f32.mrb[0].mxu0
      %v935 = vadd.f32 %v859, %v934
      %v936 = vpop.f32.mrb[0].mxu0
      %v937 = vadd.f32 %v859, %v936
      %938 = vdwg.mxu0
      %v939 = vmax.f32 %v921, 0.0
      %v940 = vmax.f32 %v923, 0.0
      %v941 = vmax.f32 %v925, 0.0
      %v942 = vmax.f32 %v927, 0.0
      %v943 = vmax.f32 %v931, 0.0
      %v944 = vmax.f32 %v933, 0.0
      %v945 = vmax.f32 %v935, 0.0
      %v946 = vmax.f32 %v937, 0.0
      %956 = vrot.lane.b32.xlu0 %v939, 127
      %v957 = vpop.permute.xlu0 %956
      %958 = vrot.lane.b32.xlu0 %v940, 127
      %v959 = vpop.permute.xlu0 %958
      %960 = vrot.lane.b32.xlu0 0.0, 127
      %v961 = vpop.permute.xlu0 %960
      %962 = vrot.lane.b32.xlu0 %v941, 127
      %v963 = vpop.permute.xlu0 %962
      %964 = vrot.lane.b32.xlu0 %v942, 127
      %v965 = vpop.permute.xlu0 %964
      %966 = vrot.lane.b32.xlu0 %v943, 127
      %v967 = vpop.permute.xlu0 %966
      %968 = vrot.lane.b32.xlu0 %v944, 127
      %v969 = vpop.permute.xlu0 %968
      %970 = vrot.lane.b32.xlu0 %v945, 127
      %v971 = vpop.permute.xlu0 %970
      %972 = vrot.lane.b32.xlu0 %v946, 127
      %v973 = vpop.permute.xlu0 %972
      %vm974 = vcmask 1039360
      %v975 = vsel %vm974, %v957, %v959
      %v976 = vsel %vm974, %v959, %v961
      %v977 = vsel %vm974, %v963, %v965
      %v978 = vsel %vm974, %v965, %v961
      %v979 = vsel %vm974, %v967, %v969
      %v980 = vsel %vm974, %v969, %v961
      %v981 = vsel %vm974, %v971, %v973
      %v982 = vsel %vm974, %v973, %v961
      %v991 = vmax.f32 %v939, %v975
      %v992 = vmax.f32 %v940, %v976
      %v993 = vmax.f32 %v941, %v977
      %v994 = vmax.f32 %v942, %v978
      %v995 = vmax.f32 %v943, %v979
      %v996 = vmax.f32 %v944, %v980
      %v997 = vmax.f32 %v945, %v981
      %v998 = vmax.f32 %v946, %v982
      %v1000 = vmax.f32 %v961, 0.0
      %1010 = vrot.lane.b32.xlu0 %v991, 112
      %v1011 = vpop.permute.xlu0 %1010
      %1012 = vrot.lane.b32.xlu0 %v992, 112
      %v1013 = vpop.permute.xlu0 %1012
      %1014 = vrot.lane.b32.xlu0 %v1000, 112
      %v1015 = vpop.permute.xlu0 %1014
      %1016 = vrot.lane.b32.xlu0 %v993, 112
      %v1017 = vpop.permute.xlu0 %1016
      %1018 = vrot.lane.b32.xlu0 %v994, 112
      %v1019 = vpop.permute.xlu0 %1018
      %1020 = vrot.lane.b32.xlu0 %v995, 112
      %v1021 = vpop.permute.xlu0 %1020
      %1022 = vrot.lane.b32.xlu0 %v996, 112
      %v1023 = vpop.permute.xlu0 %1022
      %1024 = vrot.lane.b32.xlu0 %v997, 112
      %v1025 = vpop.permute.xlu0 %1024
      %1026 = vrot.lane.b32.xlu0 %v998, 112
      %v1027 = vpop.permute.xlu0 %1026
      %vm1028 = vcmask 916480
      %v1029 = vsel %vm1028, %v1011, %v1013
      %v1030 = vsel %vm1028, %v1013, %v1015
      %v1031 = vsel %vm1028, %v1017, %v1019
      %v1032 = vsel %vm1028, %v1019, %v1015
      %v1033 = vsel %vm1028, %v1021, %v1023
      %v1034 = vsel %vm1028, %v1023, %v1015
      %v1035 = vsel %vm1028, %v1025, %v1027
      %v1036 = vsel %vm1028, %v1027, %v1015
      %v1045 = vmax.f32 %v991, %v1029
      %v1046 = vmax.f32 %v992, %v1030
      %v1047 = vmax.f32 %v993, %v1031
      %v1048 = vmax.f32 %v994, %v1032
      %v1049 = vmax.f32 %v995, %v1033
      %v1050 = vmax.f32 %v996, %v1034
      %v1051 = vmax.f32 %v997, %v1035
      %v1052 = vmax.f32 %v998, %v1036
      %v1053 = vpack.c.bf16 %v1047, %v1045
      %v1054 = vpack.c.bf16 %v1048, %v1046
      %v1055 = vpack.c.bf16 %v1051, %v1049
      %v1056 = vpack.c.bf16 %v1052, %v1050
      %v1057 = vld [vmem:[%s5] sm:$0xf]
      %v1058 = vld [vmem:[%s5 + $0x4] sm:$0xf]
      %v1059 = vld [vmem:[%s5 + $0x8] sm:$0xf]
      %v1060 = vld [vmem:[%s5 + $0xc] sm:$0xf]
      %v1061 = vld [vmem:[%s5 + $0x10] sm:$0xf]
      %v1062 = vld [vmem:[%s5 + $0x14] sm:$0xf]
      %v1063 = vld [vmem:[%s5 + $0x18] sm:$0xf]
      %v1064 = vld [vmem:[%s5 + $0x1c] sm:$0xf]
      %v1065 = vld [vmem:[%s5 + $0x20] sm:$0xf]
      %v1066 = vld [vmem:[%s5 + $0x24] sm:$0xf]
      %v1067 = vld [vmem:[%s5 + $0x28] sm:$0xf]
      %v1068 = vld [vmem:[%s5 + $0x2c] sm:$0xf]
      %v1069 = vld [vmem:[%s5 + $0x30] sm:$0xf]
      %v1070 = vld [vmem:[%s5 + $0x34] sm:$0xf]
      %v1071 = vld [vmem:[%s5 + $0x38] sm:$0xf]
      %v1072 = vld [vmem:[%s5 + $0x3c] sm:$0xf]
      %v1073 = vld [vmem:[%s5 + $0x40] sm:$0xf]
      %v1074 = vld [vmem:[%s5 + $0x44] sm:$0xf]
      %v1075 = vld [vmem:[%s5 + $0x48] sm:$0xf]
      %v1076 = vld [vmem:[%s5 + $0x4c] sm:$0xf]
      %v1077 = vld [vmem:[%s5 + $0x50] sm:$0xf]
      %v1078 = vld [vmem:[%s5 + $0x54] sm:$0xf]
      %v1079 = vld [vmem:[%s5 + $0x58] sm:$0xf]
      %v1080 = vld [vmem:[%s5 + $0x5c] sm:$0xf]
      %v1081 = vld [vmem:[%s5 + $0x60] sm:$0xf]
      %v1082 = vld [vmem:[%s5 + $0x64] sm:$0xf]
      %v1083 = vld [vmem:[%s5 + $0x68] sm:$0xf]
      %v1084 = vld [vmem:[%s5 + $0x6c] sm:$0xf]
      %v1085 = vld [vmem:[%s5 + $0x70] sm:$0xf]
      %v1086 = vld [vmem:[%s5 + $0x74] sm:$0xf]
      %v1087 = vld [vmem:[%s5 + $0x78] sm:$0xf]
      %v1088 = vld [vmem:[%s5 + $0x7c] sm:$0xf]
      %v1121 = vunpack.c.l.b16 %v1057
      %v1122 = vunpack.c.l.b16 %v1058
      %v1123 = vunpack.c.l.b16 %v1059
      %v1124 = vunpack.c.l.b16 %v1060
      %v1125 = vunpack.c.l.b16 %v1061
      %v1126 = vunpack.c.l.b16 %v1062
      %v1127 = vunpack.c.l.b16 %v1063
      %v1128 = vunpack.c.l.b16 %v1064
      %v1129 = vunpack.c.l.b16 %v1065
      %v1130 = vunpack.c.l.b16 %v1066
      %v1131 = vunpack.c.l.b16 %v1067
      %v1132 = vunpack.c.l.b16 %v1068
      %v1133 = vunpack.c.l.b16 %v1069
      %v1134 = vunpack.c.l.b16 %v1070
      %v1135 = vunpack.c.l.b16 %v1071
      %v1136 = vunpack.c.l.b16 %v1072
      %v1137 = vunpack.c.l.b16 %v1073
      %v1138 = vunpack.c.l.b16 %v1074
      %v1139 = vunpack.c.l.b16 %v1075
      %v1140 = vunpack.c.l.b16 %v1076
      %v1141 = vunpack.c.l.b16 %v1077
      %v1142 = vunpack.c.l.b16 %v1078
      %v1143 = vunpack.c.l.b16 %v1079
      %v1144 = vunpack.c.l.b16 %v1080
      %v1145 = vunpack.c.l.b16 %v1081
      %v1146 = vunpack.c.l.b16 %v1082
      %v1147 = vunpack.c.l.b16 %v1083
      %v1148 = vunpack.c.l.b16 %v1084
      %v1149 = vunpack.c.l.b16 %v1085
      %v1150 = vunpack.c.l.b16 %v1086
      %v1151 = vunpack.c.l.b16 %v1087
      %v1152 = vunpack.c.l.b16 %v1088
      %v1153 = vpack.c.b16 %v1122, %v1121
      %v1154 = vpack.c.b16 %v1124, %v1123
      %v1155 = vpack.c.b16 %v1126, %v1125
      %v1156 = vpack.c.b16 %v1128, %v1127
      %v1157 = vpack.c.b16 %v1130, %v1129
      %v1158 = vpack.c.b16 %v1132, %v1131
      %v1159 = vpack.c.b16 %v1134, %v1133
      %v1160 = vpack.c.b16 %v1136, %v1135
      %v1161 = vpack.c.b16 %v1138, %v1137
      %v1162 = vpack.c.b16 %v1140, %v1139
      %v1163 = vpack.c.b16 %v1142, %v1141
      %v1164 = vpack.c.b16 %v1144, %v1143
      %v1165 = vpack.c.b16 %v1146, %v1145
      %v1166 = vpack.c.b16 %v1148, %v1147
      %v1167 = vpack.c.b16 %v1150, %v1149
      %v1168 = vpack.c.b16 %v1152, %v1151
      %1185 = vmatprep.subr.bf16.mxu0 0
      %1186 = vmatpush1.bf16.msra.mxu0 %v1153
      %1187 = vmatprep.subr.bf16.mxu0 0
      %1188 = vmatpush1.bf16.msra.mxu0 %v1154
      %1189 = vmatprep.subr.bf16.mxu0 0
      %1190 = vmatpush1.bf16.msra.mxu0 %v1155
      %1191 = vmatprep.subr.bf16.mxu0 0
      %1192 = vmatpush1.bf16.msra.mxu0 %v1156
      %1193 = vmatprep.subr.bf16.mxu0 0
      %1194 = vmatpush1.bf16.msra.mxu0 %v1157
      %1195 = vmatprep.subr.bf16.mxu0 0
      %1196 = vmatpush1.bf16.msra.mxu0 %v1158
      %1197 = vmatprep.subr.bf16.mxu0 0
      %1198 = vmatpush1.bf16.msra.mxu0 %v1159
      %1199 = vmatprep.subr.bf16.mxu0 0
      %1200 = vmatpush1.bf16.msra.mxu0 %v1160
      %1201 = vmatprep.subr.bf16.mxu0 0
      %1202 = vmatpush1.bf16.msra.mxu0 %v1161
      %1203 = vmatprep.subr.bf16.mxu0 0
      %1204 = vmatpush1.bf16.msra.mxu0 %v1162
      %1205 = vmatprep.subr.bf16.mxu0 0
      %1206 = vmatpush1.bf16.msra.mxu0 %v1163
      %1207 = vmatprep.subr.bf16.mxu0 0
      %1208 = vmatpush1.bf16.msra.mxu0 %v1164
      %1209 = vmatprep.subr.bf16.mxu0 0
      %1210 = vmatpush1.bf16.msra.mxu0 %v1165
      %1211 = vmatprep.subr.bf16.mxu0 0
      %1212 = vmatpush1.bf16.msra.mxu0 %v1166
      %1213 = vmatprep.subr.bf16.mxu0 0
      %1214 = vmatpush1.bf16.msra.mxu0 %v1167
      %1215 = vmatprep.subr.bf16.mxu0 0
      %1216 = vmatpush1.bf16.msra.mxu0 %v1168
      %1217 = vmatprep.mubr.bf16.mxu0 %v1054
      %1218 = vmatmul.mubr.bf16.gmra.mrb[0].mxu0 %v1053
      %v1219 = vpop.f32.mrb[0].mxu0
      %v1220 = vadd.f32 0.0, %v1219
      %v1221 = vpop.f32.mrb[0].mxu0
      %v1222 = vpop.f32.mrb[0].mxu0
      %v1223 = vadd.f32 0.0, %v1222
      %v1224 = vpop.f32.mrb[0].mxu0
      %1225 = vmatprep.mubr.bf16.mxu0 %v1056
      %1226 = vmatmul.mubr.bf16.gmra.mrb[0].mxu0 %v1055
      %v1227 = vpop.f32.mrb[0].mxu0
      %v1228 = vadd.f32 0.0, %v1227
      %v1229 = vpop.f32.mrb[0].mxu0
      %v1230 = vpop.f32.mrb[0].mxu0
      %v1231 = vadd.f32 0.0, %v1230
      %v1232 = vpop.f32.mrb[0].mxu0
      %1233 = vdwg.mxu0
      %v1234 = vpack.c.bf16 %v1223, %v1220
      %v1235 = vpack.c.bf16 %v1231, %v1228
      %v1238 = vunpack.c.l.b16 %v1234
      %v1239 = vunpack.c.h.b16 %v1234
      %v1240 = vunpack.c.l.b16 %v1235
      %v1241 = vunpack.c.h.b16 %v1235
      %v1242 = vpack.c.b16 %v1238, %v1238
      %v1243 = vpack.c.b16 %v1239, %v1239
      %v1244 = vpack.c.b16 %v1240, %v1240
      %v1245 = vpack.c.b16 %v1241, %v1241
      %vm1250 = vcmask 519168
      %1251 = vst.msk [vmem:[%s251] sm:$0xf] %vm1250, %v1242
      %1252 = vst.msk [vmem:[%s251 + $0x4] sm:$0xf] %vm1250, %v1243
      %1253 = vst.msk [vmem:[%s251 + $0x8] sm:$0xf] %vm1250, %v1244
      %1254 = vst.msk [vmem:[%s251 + $0xc] sm:$0xf] %vm1250, %v1245
      %p1255 = scmp.lt.s32.totalorder %s17, 1
      %s1256 = scalar_select %p1255, %s17, 1
      %s1257 = smul.addr %s1256, 4
      %s1258 = smul.addr %s1257, 4
      %s1259 = scalar_lea.vmem %s6, %s1258
      // Predicated region
      $region45: #{simple_cnn_forward.2} parent=43 // pred_check
        %p1260 = pneg %p166
      $region46: #{simple_cnn_forward.2} parent=43 // pred_check_branch
        %1262 = sbr.rel (%p1260) target = $region48
      $region47: #{simple_cnn_forward.2} parent=43 // pred_region
        _
      $region48: #{simple_cnn_forward.2} parent=43 // pred_fallthru
        _
    $region44: #{simple_cnn_forward.2} parent=5 // pred_fallthru
      _
    %p1263 = scmp.le.s32.totalorder 2, %s12
    // Predicated region
    $region49: #{simple_cnn_forward.2} parent=5 // pred_check
      %p1264 = pneg %p1263
    $region50: #{simple_cnn_forward.2} parent=5 // pred_check_branch
      %1266 = sbr.rel (%p1264) target = $region52
    $region51: #{simple_cnn_forward.2} parent=5 // pred_region
      %s1267 = ssub.s32 %s12, 2
      // Predicated region
      $region53: #{simple_cnn_forward.2} parent=51 // pred_check
        %p1268 = pneg %p172
      $region54: #{simple_cnn_forward.2} parent=51 // pred_check_branch
        %1270 = sbr.rel (%p1268) target = $region56
      $region55: #{simple_cnn_forward.2} parent=51 // pred_region
        %p1271 = scmp.lt.s32.totalorder %s18, 1
        %s1272 = scalar_select %p1271, %s18, 1
        %s1273 = smul.addr %s1272, 4
        %s1274 = smul.addr %s1273, 4
        %s1275 = scalar_lea.vmem %s6, %s1274
      $region56: #{simple_cnn_forward.2} parent=51 // pred_fallthru
        _
    $region52: #{simple_cnn_forward.2} parent=5 // pred_fallthru
      _
  $region6: #{simple_cnn_forward.2} parent=0 // loop_footer
    %s16 = sadd.s32 1, %s12
  $region7: #{simple_cnn_forward.2} parent=0 // loop_footer_branch
    %11 = sbr.rel target = $region3
  $region8: #{simple_cnn_forward.2} parent=0 // loop_exit
    _

// kernel: simple_cnn_forward.3
$region0: #{simple_cnn_forward.3}
  #allocation0 [shape = 'u32[]', space=smem, size = 0x4, offset = 0x4, fixed_abs, tag = 'smem constant byte address 0x4 - core index']
  #allocation1 [shape = 'u32[144,128]{1,0:T(1,128)}', space=vmem, size = 0x12000, scoped, tag = 'internal scratch']
  %s0 = inlined_call_operand.vmem [shape: bf16[2,2048], index: 0, kind: input, shape index: {}]
  %s1 = inlined_call_operand.vmem [shape: bf16[2048,128], index: 1, kind: input, shape index: {}]
  %s2 = inlined_call_operand.vmem [shape: f32[1,128], index: 2, kind: input, shape index: {}]
  %s3 = inlined_call_operand.vmem [shape: bf16[128,10], index: 3, kind: input, shape index: {}]
  %s4 = inlined_call_operand.vmem [shape: f32[1,10], index: 4, kind: input, shape index: {}]
  %s5 = inlined_call_operand.hbm [shape: f32[2,10], index: 5, kind: output, shape index: {}]
  %s6 = sld [smem:[#allocation0]]
  $region30: #{simple_cnn_forward.3} parent=0
    _
  %s8 = ssub.s32 1, %s6
  %s9 = scalar_select 0, %s8, %s6
  $region1: #{simple_cnn_forward.3} parent=0
    #allocation2 [shape = 'u8[1024]{0}', space=vmem, size = 0x400, scoped, tag = 'output window, operand 0, single buffered']
    #allocation3 [shape = 's32[1]{0}', space=sflag, size = 0x4, scoped, tag = 'scoped memory for simple_cnn_forward.3']
    %10 = vsyncpa [#allocation3], 0
    // Predicated region
    $region2: #{simple_cnn_forward.3} parent=1 // pred_check
      _
    $region3: #{simple_cnn_forward.3} parent=1 // pred_check_branch
      %12 = sbr.rel (0) target = $region5
    $region4: #{simple_cnn_forward.3} parent=1 // pred_region
      _
    $region5: #{simple_cnn_forward.3} parent=1 // pred_fallthru
      _
    // Predicated region
    $region6: #{simple_cnn_forward.3} parent=1 // pred_check
      _
    $region7: #{simple_cnn_forward.3} parent=1 // pred_check_branch
      %14 = sbr.rel (0) target = $region9
    $region8: #{simple_cnn_forward.3} parent=1 // pred_region
      _
    $region9: #{simple_cnn_forward.3} parent=1 // pred_fallthru
      _
    // Predicated region
    $region10: #{simple_cnn_forward.3} parent=1 // pred_check
      _
    $region11: #{simple_cnn_forward.3} parent=1 // pred_check_branch
      %16 = sbr.rel (0) target = $region13
    $region12: #{simple_cnn_forward.3} parent=1 // pred_region
      _
    $region13: #{simple_cnn_forward.3} parent=1 // pred_fallthru
      _
    // Predicated region
    $region14: #{simple_cnn_forward.3} parent=1 // pred_check
      _
    $region15: #{simple_cnn_forward.3} parent=1 // pred_check_branch
      %18 = sbr.rel (0) target = $region17
    $region16: #{simple_cnn_forward.3} parent=1 // pred_region
      _
    $region17: #{simple_cnn_forward.3} parent=1 // pred_fallthru
      _
    // Predicated region
    $region18: #{simple_cnn_forward.3} parent=1 // pred_check
      _
    $region19: #{simple_cnn_forward.3} parent=1 // pred_check_branch
      %20 = sbr.rel (0) target = $region21
    $region20: #{simple_cnn_forward.3} parent=1 // pred_region
      _
    $region21: #{simple_cnn_forward.3} parent=1 // pred_fallthru
      _
    %v22 = vld [vmem:[%s0] sm:$0xff]
    %v23 = vld [vmem:[%s0 + $0x8] sm:$0xff]
    %v24 = vld [vmem:[%s1] sm:$0xf]
    %v25 = vld [vmem:[%s1 + $0x4] sm:$0xf]
    %v26 = vld [vmem:[%s1 + $0x8] sm:$0xf]
    %v27 = vld [vmem:[%s1 + $0xc] sm:$0xf]
    %v28 = vld [vmem:[%s1 + $0x10] sm:$0xf]
    %v29 = vld [vmem:[%s1 + $0x14] sm:$0xf]
    %v30 = vld [vmem:[%s1 + $0x18] sm:$0xf]
    %v31 = vld [vmem:[%s1 + $0x1c] sm:$0xf]
    %v32 = vld [vmem:[%s1 + $0x20] sm:$0xf]
    %v33 = vld [vmem:[%s1 + $0x24] sm:$0xf]
    %v34 = vld [vmem:[%s1 + $0x28] sm:$0xf]
    %v35 = vld [vmem:[%s1 + $0x2c] sm:$0xf]
    %v36 = vld [vmem:[%s1 + $0x30] sm:$0xf]
    %v37 = vld [vmem:[%s1 + $0x34] sm:$0xf]
    %v38 = vld [vmem:[%s1 + $0x38] sm:$0xf]
    %v39 = vld [vmem:[%s1 + $0x3c] sm:$0xf]
    %v40 = vld [vmem:[%s1 + $0x40] sm:$0xf]
    %v41 = vld [vmem:[%s1 + $0x44] sm:$0xf]
    %v42 = vld [vmem:[%s1 + $0x48] sm:$0xf]
    %v43 = vld [vmem:[%s1 + $0x4c] sm:$0xf]
    %v44 = vld [vmem:[%s1 + $0x50] sm:$0xf]
    %v45 = vld [vmem:[%s1 + $0x54] sm:$0xf]
    %v46 = vld [vmem:[%s1 + $0x58] sm:$0xf]
    %v47 = vld [vmem:[%s1 + $0x5c] sm:$0xf]
    %v48 = vld [vmem:[%s1 + $0x60] sm:$0xf]
    %v49 = vld [vmem:[%s1 + $0x64] sm:$0xf]
    %v50 = vld [vmem:[%s1 + $0x68] sm:$0xf]
    %v51 = vld [vmem:[%s1 + $0x6c] sm:$0xf]
    %v52 = vld [vmem:[%s1 + $0x70] sm:$0xf]
    %v53 = vld [vmem:[%s1 + $0x74] sm:$0xf]
    %v54 = vld [vmem:[%s1 + $0x78] sm:$0xf]
    %v55 = vld [vmem:[%s1 + $0x7c] sm:$0xf]
    %v56 = vld [vmem:[%s1 + $0x80] sm:$0xf]
    %v57 = vld [vmem:[%s1 + $0x84] sm:$0xf]
    %v58 = vld [vmem:[%s1 + $0x88] sm:$0xf]
    %v59 = vld [vmem:[%s1 + $0x8c] sm:$0xf]
    %v60 = vld [vmem:[%s1 + $0x90] sm:$0xf]
    %v61 = vld [vmem:[%s1 + $0x94] sm:$0xf]
    %v62 = vld [vmem:[%s1 + $0x98] sm:$0xf]
    %v63 = vld [vmem:[%s1 + $0x9c] sm:$0xf]
    %v64 = vld [vmem:[%s1 + $0xa0] sm:$0xf]
    %v65 = vld [vmem:[%s1 + $0xa4] sm:$0xf]
    %v66 = vld [vmem:[%s1 + $0xa8] sm:$0xf]
    %v67 = vld [vmem:[%s1 + $0xac] sm:$0xf]
    %v68 = vld [vmem:[%s1 + $0xb0] sm:$0xf]
    %v69 = vld [vmem:[%s1 + $0xb4] sm:$0xf]
    %v70 = vld [vmem:[%s1 + $0xb8] sm:$0xf]
    %v71 = vld [vmem:[%s1 + $0xbc] sm:$0xf]
    %v72 = vld [vmem:[%s1 + $0xc0] sm:$0xf]
    %v73 = vld [vmem:[%s1 + $0xc4] sm:$0xf]
    %v74 = vld [vmem:[%s1 + $0xc8] sm:$0xf]
    %v75 = vld [vmem:[%s1 + $0xcc] sm:$0xf]
    %v76 = vld [vmem:[%s1 + $0xd0] sm:$0xf]
    %v77 = vld [vmem:[%s1 + $0xd4] sm:$0xf]
    %v78 = vld [vmem:[%s1 + $0xd8] sm:$0xf]
    %v79 = vld [vmem:[%s1 + $0xdc] sm:$0xf]
    %v80 = vld [vmem:[%s1 + $0xe0] sm:$0xf]
    %v81 = vld [vmem:[%s1 + $0xe4] sm:$0xf]
    %v82 = vld [vmem:[%s1 + $0xe8] sm:$0xf]
    %v83 = vld [vmem:[%s1 + $0xec] sm:$0xf]
    %v84 = vld [vmem:[%s1 + $0xf0] sm:$0xf]
    %v85 = vld [vmem:[%s1 + $0xf4] sm:$0xf]
    %v86 = vld [vmem:[%s1 + $0xf8] sm:$0xf]
    %v87 = vld [vmem:[%s1 + $0xfc] sm:$0xf]
    %v88 = vld [vmem:[%s1 + $0x100] sm:$0xf]
    %v89 = vld [vmem:[%s1 + $0x104] sm:$0xf]
    %v90 = vld [vmem:[%s1 + $0x108] sm:$0xf]
    %v91 = vld [vmem:[%s1 + $0x10c] sm:$0xf]
    %v92 = vld [vmem:[%s1 + $0x110] sm:$0xf]
    %v93 = vld [vmem:[%s1 + $0x114] sm:$0xf]
    %v94 = vld [vmem:[%s1 + $0x118] sm:$0xf]
    %v95 = vld [vmem:[%s1 + $0x11c] sm:$0xf]
    %v96 = vld [vmem:[%s1 + $0x120] sm:$0xf]
    %v97 = vld [vmem:[%s1 + $0x124] sm:$0xf]
    %v98 = vld [vmem:[%s1 + $0x128] sm:$0xf]
    %v99 = vld [vmem:[%s1 + $0x12c] sm:$0xf]
    %v100 = vld [vmem:[%s1 + $0x130] sm:$0xf]
    %v101 = vld [vmem:[%s1 + $0x134] sm:$0xf]
    %v102 = vld [vmem:[%s1 + $0x138] sm:$0xf]
    %v103 = vld [vmem:[%s1 + $0x13c] sm:$0xf]
    %v104 = vld [vmem:[%s1 + $0x140] sm:$0xf]
    %v105 = vld [vmem:[%s1 + $0x144] sm:$0xf]
    %v106 = vld [vmem:[%s1 + $0x148] sm:$0xf]
    %v107 = vld [vmem:[%s1 + $0x14c] sm:$0xf]
    %v108 = vld [vmem:[%s1 + $0x150] sm:$0xf]
    %v109 = vld [vmem:[%s1 + $0x154] sm:$0xf]
    %v110 = vld [vmem:[%s1 + $0x158] sm:$0xf]
    %v111 = vld [vmem:[%s1 + $0x15c] sm:$0xf]
    %v112 = vld [vmem:[%s1 + $0x160] sm:$0xf]
    %v113 = vld [vmem:[%s1 + $0x164] sm:$0xf]
    %v114 = vld [vmem:[%s1 + $0x168] sm:$0xf]
    %v115 = vld [vmem:[%s1 + $0x16c] sm:$0xf]
    %v116 = vld [vmem:[%s1 + $0x170] sm:$0xf]
    %v117 = vld [vmem:[%s1 + $0x174] sm:$0xf]
    %v118 = vld [vmem:[%s1 + $0x178] sm:$0xf]
    %v119 = vld [vmem:[%s1 + $0x17c] sm:$0xf]
    %v120 = vld [vmem:[%s1 + $0x180] sm:$0xf]
    %v121 = vld [vmem:[%s1 + $0x184] sm:$0xf]
    %v122 = vld [vmem:[%s1 + $0x188] sm:$0xf]
    %v123 = vld [vmem:[%s1 + $0x18c] sm:$0xf]
    %v124 = vld [vmem:[%s1 + $0x190] sm:$0xf]
    %v125 = vld [vmem:[%s1 + $0x194] sm:$0xf]
    %v126 = vld [vmem:[%s1 + $0x198] sm:$0xf]
    %v127 = vld [vmem:[%s1 + $0x19c] sm:$0xf]
    %v128 = vld [vmem:[%s1 + $0x1a0] sm:$0xf]
    %v129 = vld [vmem:[%s1 + $0x1a4] sm:$0xf]
    %v130 = vld [vmem:[%s1 + $0x1a8] sm:$0xf]
    %v131 = vld [vmem:[%s1 + $0x1ac] sm:$0xf]
    %v132 = vld [vmem:[%s1 + $0x1b0] sm:$0xf]
    %v133 = vld [vmem:[%s1 + $0x1b4] sm:$0xf]
    %v134 = vld [vmem:[%s1 + $0x1b8] sm:$0xf]
    %v135 = vld [vmem:[%s1 + $0x1bc] sm:$0xf]
    %v136 = vld [vmem:[%s1 + $0x1c0] sm:$0xf]
    %v137 = vld [vmem:[%s1 + $0x1c4] sm:$0xf]
    %v138 = vld [vmem:[%s1 + $0x1c8] sm:$0xf]
    %v139 = vld [vmem:[%s1 + $0x1cc] sm:$0xf]
    %v140 = vld [vmem:[%s1 + $0x1d0] sm:$0xf]
    %v141 = vld [vmem:[%s1 + $0x1d4] sm:$0xf]
    %v142 = vld [vmem:[%s1 + $0x1d8] sm:$0xf]
    %v143 = vld [vmem:[%s1 + $0x1dc] sm:$0xf]
    %v144 = vld [vmem:[%s1 + $0x1e0] sm:$0xf]
    %v145 = vld [vmem:[%s1 + $0x1e4] sm:$0xf]
    %v146 = vld [vmem:[%s1 + $0x1e8] sm:$0xf]
    %v147 = vld [vmem:[%s1 + $0x1ec] sm:$0xf]
    %v148 = vld [vmem:[%s1 + $0x1f0] sm:$0xf]
    %v149 = vld [vmem:[%s1 + $0x1f4] sm:$0xf]
    %v150 = vld [vmem:[%s1 + $0x1f8] sm:$0xf]
    %v151 = vld [vmem:[%s1 + $0x1fc] sm:$0xf]
    %v152 = vld [vmem:[%s1 + $0x200] sm:$0xf]
    %v153 = vld [vmem:[%s1 + $0x204] sm:$0xf]
    %v154 = vld [vmem:[%s1 + $0x208] sm:$0xf]
    %v155 = vld [vmem:[%s1 + $0x20c] sm:$0xf]
    %v156 = vld [vmem:[%s1 + $0x210] sm:$0xf]
    %v157 = vld [vmem:[%s1 + $0x214] sm:$0xf]
    %v158 = vld [vmem:[%s1 + $0x218] sm:$0xf]
    %v159 = vld [vmem:[%s1 + $0x21c] sm:$0xf]
    %v160 = vld [vmem:[%s1 + $0x220] sm:$0xf]
    %v161 = vld [vmem:[%s1 + $0x224] sm:$0xf]
    %v162 = vld [vmem:[%s1 + $0x228] sm:$0xf]
    %v163 = vld [vmem:[%s1 + $0x22c] sm:$0xf]
    %v164 = vld [vmem:[%s1 + $0x230] sm:$0xf]
    %v165 = vld [vmem:[%s1 + $0x234] sm:$0xf]
    %v166 = vld [vmem:[%s1 + $0x238] sm:$0xf]
    %v167 = vld [vmem:[%s1 + $0x23c] sm:$0xf]
    %v168 = vld [vmem:[%s1 + $0x240] sm:$0xf]
    %v169 = vld [vmem:[%s1 + $0x244] sm:$0xf]
    %v170 = vld [vmem:[%s1 + $0x248] sm:$0xf]
    %v171 = vld [vmem:[%s1 + $0x24c] sm:$0xf]
    %v172 = vld [vmem:[%s1 + $0x250] sm:$0xf]
    %v173 = vld [vmem:[%s1 + $0x254] sm:$0xf]
    %v174 = vld [vmem:[%s1 + $0x258] sm:$0xf]
    %v175 = vld [vmem:[%s1 + $0x25c] sm:$0xf]
    %v176 = vld [vmem:[%s1 + $0x260] sm:$0xf]
    %v177 = vld [vmem:[%s1 + $0x264] sm:$0xf]
    %v178 = vld [vmem:[%s1 + $0x268] sm:$0xf]
    %v179 = vld [vmem:[%s1 + $0x26c] sm:$0xf]
    %v180 = vld [vmem:[%s1 + $0x270] sm:$0xf]
    %v181 = vld [vmem:[%s1 + $0x274] sm:$0xf]
    %v182 = vld [vmem:[%s1 + $0x278] sm:$0xf]
    %v183 = vld [vmem:[%s1 + $0x27c] sm:$0xf]
    %v184 = vld [vmem:[%s1 + $0x280] sm:$0xf]
    %v185 = vld [vmem:[%s1 + $0x284] sm:$0xf]
    %v186 = vld [vmem:[%s1 + $0x288] sm:$0xf]
    %v187 = vld [vmem:[%s1 + $0x28c] sm:$0xf]
    %v188 = vld [vmem:[%s1 + $0x290] sm:$0xf]
    %v189 = vld [vmem:[%s1 + $0x294] sm:$0xf]
    %v190 = vld [vmem:[%s1 + $0x298] sm:$0xf]
    %v191 = vld [vmem:[%s1 + $0x29c] sm:$0xf]
    %v192 = vld [vmem:[%s1 + $0x2a0] sm:$0xf]
    %v193 = vld [vmem:[%s1 + $0x2a4] sm:$0xf]
    %v194 = vld [vmem:[%s1 + $0x2a8] sm:$0xf]
    %v195 = vld [vmem:[%s1 + $0x2ac] sm:$0xf]
    %v196 = vld [vmem:[%s1 + $0x2b0] sm:$0xf]
    %v197 = vld [vmem:[%s1 + $0x2b4] sm:$0xf]
    %v198 = vld [vmem:[%s1 + $0x2b8] sm:$0xf]
    %v199 = vld [vmem:[%s1 + $0x2bc] sm:$0xf]
    %v200 = vld [vmem:[%s1 + $0x2c0] sm:$0xf]
    %v201 = vld [vmem:[%s1 + $0x2c4] sm:$0xf]
    %v202 = vld [vmem:[%s1 + $0x2c8] sm:$0xf]
    %v203 = vld [vmem:[%s1 + $0x2cc] sm:$0xf]
    %v204 = vld [vmem:[%s1 + $0x2d0] sm:$0xf]
    %v205 = vld [vmem:[%s1 + $0x2d4] sm:$0xf]
    %v206 = vld [vmem:[%s1 + $0x2d8] sm:$0xf]
    %v207 = vld [vmem:[%s1 + $0x2dc] sm:$0xf]
    %v208 = vld [vmem:[%s1 + $0x2e0] sm:$0xf]
    %v209 = vld [vmem:[%s1 + $0x2e4] sm:$0xf]
    %v210 = vld [vmem:[%s1 + $0x2e8] sm:$0xf]
    %v211 = vld [vmem:[%s1 + $0x2ec] sm:$0xf]
    %v212 = vld [vmem:[%s1 + $0x2f0] sm:$0xf]
    %v213 = vld [vmem:[%s1 + $0x2f4] sm:$0xf]
    %v214 = vld [vmem:[%s1 + $0x2f8] sm:$0xf]
    %v215 = vld [vmem:[%s1 + $0x2fc] sm:$0xf]
    %v216 = vld [vmem:[%s1 + $0x300] sm:$0xf]
    %v217 = vld [vmem:[%s1 + $0x304] sm:$0xf]
    %v218 = vld [vmem:[%s1 + $0x308] sm:$0xf]
    %v219 = vld [vmem:[%s1 + $0x30c] sm:$0xf]
    %v220 = vld [vmem:[%s1 + $0x310] sm:$0xf]
    %v221 = vld [vmem:[%s1 + $0x314] sm:$0xf]
    %v222 = vld [vmem:[%s1 + $0x318] sm:$0xf]
    %v223 = vld [vmem:[%s1 + $0x31c] sm:$0xf]
    %v224 = vld [vmem:[%s1 + $0x320] sm:$0xf]
    %v225 = vld [vmem:[%s1 + $0x324] sm:$0xf]
    %v226 = vld [vmem:[%s1 + $0x328] sm:$0xf]
    %v227 = vld [vmem:[%s1 + $0x32c] sm:$0xf]
    %v228 = vld [vmem:[%s1 + $0x330] sm:$0xf]
    %v229 = vld [vmem:[%s1 + $0x334] sm:$0xf]
    %v230 = vld [vmem:[%s1 + $0x338] sm:$0xf]
    %v231 = vld [vmem:[%s1 + $0x33c] sm:$0xf]
    %v232 = vld [vmem:[%s1 + $0x340] sm:$0xf]
    %v233 = vld [vmem:[%s1 + $0x344] sm:$0xf]
    %v234 = vld [vmem:[%s1 + $0x348] sm:$0xf]
    %v235 = vld [vmem:[%s1 + $0x34c] sm:$0xf]
    %v236 = vld [vmem:[%s1 + $0x350] sm:$0xf]
    %v237 = vld [vmem:[%s1 + $0x354] sm:$0xf]
    %v238 = vld [vmem:[%s1 + $0x358] sm:$0xf]
    %v239 = vld [vmem:[%s1 + $0x35c] sm:$0xf]
    %v240 = vld [vmem:[%s1 + $0x360] sm:$0xf]
    %v241 = vld [vmem:[%s1 + $0x364] sm:$0xf]
    %v242 = vld [vmem:[%s1 + $0x368] sm:$0xf]
    %v243 = vld [vmem:[%s1 + $0x36c] sm:$0xf]
    %v244 = vld [vmem:[%s1 + $0x370] sm:$0xf]
    %v245 = vld [vmem:[%s1 + $0x374] sm:$0xf]
    %v246 = vld [vmem:[%s1 + $0x378] sm:$0xf]
    %v247 = vld [vmem:[%s1 + $0x37c] sm:$0xf]
    %v248 = vld [vmem:[%s1 + $0x380] sm:$0xf]
    %v249 = vld [vmem:[%s1 + $0x384] sm:$0xf]
    %v250 = vld [vmem:[%s1 + $0x388] sm:$0xf]
    %v251 = vld [vmem:[%s1 + $0x38c] sm:$0xf]
    %v252 = vld [vmem:[%s1 + $0x390] sm:$0xf]
    %v253 = vld [vmem:[%s1 + $0x394] sm:$0xf]
    %v254 = vld [vmem:[%s1 + $0x398] sm:$0xf]
    %v255 = vld [vmem:[%s1 + $0x39c] sm:$0xf]
    %v256 = vld [vmem:[%s1 + $0x3a0] sm:$0xf]
    %v257 = vld [vmem:[%s1 + $0x3a4] sm:$0xf]
    %v258 = vld [vmem:[%s1 + $0x3a8] sm:$0xf]
    %v259 = vld [vmem:[%s1 + $0x3ac] sm:$0xf]
    %v260 = vld [vmem:[%s1 + $0x3b0] sm:$0xf]
    %v261 = vld [vmem:[%s1 + $0x3b4] sm:$0xf]
    %v262 = vld [vmem:[%s1 + $0x3b8] sm:$0xf]
    %v263 = vld [vmem:[%s1 + $0x3bc] sm:$0xf]
    %v264 = vld [vmem:[%s1 + $0x3c0] sm:$0xf]
    %v265 = vld [vmem:[%s1 + $0x3c4] sm:$0xf]
    %v266 = vld [vmem:[%s1 + $0x3c8] sm:$0xf]
    %v267 = vld [vmem:[%s1 + $0x3cc] sm:$0xf]
    %v268 = vld [vmem:[%s1 + $0x3d0] sm:$0xf]
    %v269 = vld [vmem:[%s1 + $0x3d4] sm:$0xf]
    %v270 = vld [vmem:[%s1 + $0x3d8] sm:$0xf]
    %v271 = vld [vmem:[%s1 + $0x3dc] sm:$0xf]
    %v272 = vld [vmem:[%s1 + $0x3e0] sm:$0xf]
    %v273 = vld [vmem:[%s1 + $0x3e4] sm:$0xf]
    %v274 = vld [vmem:[%s1 + $0x3e8] sm:$0xf]
    %v275 = vld [vmem:[%s1 + $0x3ec] sm:$0xf]
    %v276 = vld [vmem:[%s1 + $0x3f0] sm:$0xf]
    %v277 = vld [vmem:[%s1 + $0x3f4] sm:$0xf]
    %v278 = vld [vmem:[%s1 + $0x3f8] sm:$0xf]
    %v279 = vld [vmem:[%s1 + $0x3fc] sm:$0xf]
    %v280 = vld [vmem:[%s2] sm:$0x1]
    %v282 = vlaneseq
    %v283 = vshrl.u32 %v282, 7
    %v284 = vsub.s32 0, %v283
    %v285 = vrot.slane %v280, %v284
    %v289 = vcombine.high %v22, %v22
    %v291 = vunpack.c.l.s4 1966171168
    %v292 = vunpack.c.0.s8 %v291
    %v293 = vlaneseq
    %v294 = vshrl.u32 %v293, 7
    %v295 = vsub.s32 %v292, %v294
    %v296 = vrot.slane %v22, %v295
    %v298 = vunpack.c.l.s4 1966171168
    %v299 = vunpack.c.0.s8 %v298
    %v300 = vlaneseq
    %v301 = vshrl.u32 %v300, 7
    %v302 = vsub.s32 %v299, %v301
    %v303 = vrot.slane %v289, %v302
    %v304 = vcombine.high %v296, %v296
    %v305 = vcombine.high %v303, %v303
    %v307 = vunpack.c.l.s4 1966171168
    %v308 = vunpack.c.0.s8 %v307
    %v309 = vlaneseq
    %v310 = vshrl.u32 %v309, 7
    %v311 = vsub.s32 %v308, %v310
    %v312 = vrot.slane %v296, %v311
    %v314 = vunpack.c.l.s4 1966171168
    %v315 = vunpack.c.0.s8 %v314
    %v316 = vlaneseq
    %v317 = vshrl.u32 %v316, 7
    %v318 = vsub.s32 %v315, %v317
    %v319 = vrot.slane %v303, %v318
    %v321 = vunpack.c.l.s4 1966171168
    %v322 = vunpack.c.0.s8 %v321
    %v323 = vlaneseq
    %v324 = vshrl.u32 %v323, 7
    %v325 = vsub.s32 %v322, %v324
    %v326 = vrot.slane %v304, %v325
    %v328 = vunpack.c.l.s4 1966171168
    %v329 = vunpack.c.0.s8 %v328
    %v330 = vlaneseq
    %v331 = vshrl.u32 %v330, 7
    %v332 = vsub.s32 %v329, %v331
    %v333 = vrot.slane %v305, %v332
    %v334 = vcombine.high %v312, %v312
    %v335 = vcombine.high %v319, %v319
    %v336 = vcombine.high %v326, %v326
    %v337 = vcombine.high %v333, %v333
    %v338 = vcombine.high %v23, %v23
    %v340 = vunpack.c.l.s4 1966171168
    %v341 = vunpack.c.0.s8 %v340
    %v342 = vlaneseq
    %v343 = vshrl.u32 %v342, 7
    %v344 = vsub.s32 %v341, %v343
    %v345 = vrot.slane %v23, %v344
    %v347 = vunpack.c.l.s4 1966171168
    %v348 = vunpack.c.0.s8 %v347
    %v349 = vlaneseq
    %v350 = vshrl.u32 %v349, 7
    %v351 = vsub.s32 %v348, %v350
    %v352 = vrot.slane %v338, %v351
    %v353 = vcombine.high %v345, %v345
    %v354 = vcombine.high %v352, %v352
    %v356 = vunpack.c.l.s4 1966171168
    %v357 = vunpack.c.0.s8 %v356
    %v358 = vlaneseq
    %v359 = vshrl.u32 %v358, 7
    %v360 = vsub.s32 %v357, %v359
    %v361 = vrot.slane %v345, %v360
    %v363 = vunpack.c.l.s4 1966171168
    %v364 = vunpack.c.0.s8 %v363
    %v365 = vlaneseq
    %v366 = vshrl.u32 %v365, 7
    %v367 = vsub.s32 %v364, %v366
    %v368 = vrot.slane %v352, %v367
    %v370 = vunpack.c.l.s4 1966171168
    %v371 = vunpack.c.0.s8 %v370
    %v372 = vlaneseq
    %v373 = vshrl.u32 %v372, 7
    %v374 = vsub.s32 %v371, %v373
    %v375 = vrot.slane %v353, %v374
    %v377 = vunpack.c.l.s4 1966171168
    %v378 = vunpack.c.0.s8 %v377
    %v379 = vlaneseq
    %v380 = vshrl.u32 %v379, 7
    %v381 = vsub.s32 %v378, %v380
    %v382 = vrot.slane %v354, %v381
    %v383 = vcombine.high %v361, %v361
    %v384 = vcombine.high %v368, %v368
    %v385 = vcombine.high %v375, %v375
    %v386 = vcombine.high %v382, %v382
    %v659 = vunpack.c.l.b16 %v24
    %v660 = vunpack.c.l.b16 %v25
    %v661 = vunpack.c.l.b16 %v26
    %v662 = vunpack.c.l.b16 %v27
    %v663 = vunpack.c.l.b16 %v28
    %v664 = vunpack.c.l.b16 %v29
    %v665 = vunpack.c.l.b16 %v30
    %v666 = vunpack.c.l.b16 %v31
    %v667 = vunpack.c.l.b16 %v32
    %v668 = vunpack.c.l.b16 %v33
    %v669 = vunpack.c.l.b16 %v34
    %v670 = vunpack.c.l.b16 %v35
    %v671 = vunpack.c.l.b16 %v36
    %v672 = vunpack.c.l.b16 %v37
    %v673 = vunpack.c.l.b16 %v38
    %v674 = vunpack.c.l.b16 %v39
    %v675 = vunpack.c.l.b16 %v40
    %v676 = vunpack.c.l.b16 %v41
    %v677 = vunpack.c.l.b16 %v42
    %v678 = vunpack.c.l.b16 %v43
    %v679 = vunpack.c.l.b16 %v44
    %v680 = vunpack.c.l.b16 %v45
    %v681 = vunpack.c.l.b16 %v46
    %v682 = vunpack.c.l.b16 %v47
    %v683 = vunpack.c.l.b16 %v48
    %v684 = vunpack.c.l.b16 %v49
    %v685 = vunpack.c.l.b16 %v50
    %v686 = vunpack.c.l.b16 %v51
    %v687 = vunpack.c.l.b16 %v52
    %v688 = vunpack.c.l.b16 %v53
    %v689 = vunpack.c.l.b16 %v54
    %v690 = vunpack.c.l.b16 %v55
    %v691 = vunpack.c.l.b16 %v56
    %v692 = vunpack.c.l.b16 %v57
    %v693 = vunpack.c.l.b16 %v58
    %v694 = vunpack.c.l.b16 %v59
    %v695 = vunpack.c.l.b16 %v60
    %v696 = vunpack.c.l.b16 %v61
    %v697 = vunpack.c.l.b16 %v62
    %v698 = vunpack.c.l.b16 %v63
    %v699 = vunpack.c.l.b16 %v64
    %v700 = vunpack.c.l.b16 %v65
    %v701 = vunpack.c.l.b16 %v66
    %v702 = vunpack.c.l.b16 %v67
    %v703 = vunpack.c.l.b16 %v68
    %v704 = vunpack.c.l.b16 %v69
    %v705 = vunpack.c.l.b16 %v70
    %v706 = vunpack.c.l.b16 %v71
    %v707 = vunpack.c.l.b16 %v72
    %v708 = vunpack.c.l.b16 %v73
    %v709 = vunpack.c.l.b16 %v74
    %v710 = vunpack.c.l.b16 %v75
    %v711 = vunpack.c.l.b16 %v76
    %v712 = vunpack.c.l.b16 %v77
    %v713 = vunpack.c.l.b16 %v78
    %v714 = vunpack.c.l.b16 %v79
    %v715 = vunpack.c.l.b16 %v80
    %v716 = vunpack.c.l.b16 %v81
    %v717 = vunpack.c.l.b16 %v82
    %v718 = vunpack.c.l.b16 %v83
    %v719 = vunpack.c.l.b16 %v84
    %v720 = vunpack.c.l.b16 %v85
    %v721 = vunpack.c.l.b16 %v86
    %v722 = vunpack.c.l.b16 %v87
    %v723 = vunpack.c.l.b16 %v88
    %v724 = vunpack.c.l.b16 %v89
    %v725 = vunpack.c.l.b16 %v90
    %v726 = vunpack.c.l.b16 %v91
    %v727 = vunpack.c.l.b16 %v92
    %v728 = vunpack.c.l.b16 %v93
    %v729 = vunpack.c.l.b16 %v94
    %v730 = vunpack.c.l.b16 %v95
    %v731 = vunpack.c.l.b16 %v96
    %v732 = vunpack.c.l.b16 %v97
    %v733 = vunpack.c.l.b16 %v98
    %v734 = vunpack.c.l.b16 %v99
    %v735 = vunpack.c.l.b16 %v100
    %v736 = vunpack.c.l.b16 %v101
    %v737 = vunpack.c.l.b16 %v102
    %v738 = vunpack.c.l.b16 %v103
    %v739 = vunpack.c.l.b16 %v104
    %v740 = vunpack.c.l.b16 %v105
    %v741 = vunpack.c.l.b16 %v106
    %v742 = vunpack.c.l.b16 %v107
    %v743 = vunpack.c.l.b16 %v108
    %v744 = vunpack.c.l.b16 %v109
    %v745 = vunpack.c.l.b16 %v110
    %v746 = vunpack.c.l.b16 %v111
    %v747 = vunpack.c.l.b16 %v112
    %v748 = vunpack.c.l.b16 %v113
    %v749 = vunpack.c.l.b16 %v114
    %v750 = vunpack.c.l.b16 %v115
    %v751 = vunpack.c.l.b16 %v116
    %v752 = vunpack.c.l.b16 %v117
    %v753 = vunpack.c.l.b16 %v118
    %v754 = vunpack.c.l.b16 %v119
    %v755 = vunpack.c.l.b16 %v120
    %v756 = vunpack.c.l.b16 %v121
    %v757 = vunpack.c.l.b16 %v122
    %v758 = vunpack.c.l.b16 %v123
    %v759 = vunpack.c.l.b16 %v124
    %v760 = vunpack.c.l.b16 %v125
    %v761 = vunpack.c.l.b16 %v126
    %v762 = vunpack.c.l.b16 %v127
    %v763 = vunpack.c.l.b16 %v128
    %v764 = vunpack.c.l.b16 %v129
    %v765 = vunpack.c.l.b16 %v130
    %v766 = vunpack.c.l.b16 %v131
    %v767 = vunpack.c.l.b16 %v132
    %v768 = vunpack.c.l.b16 %v133
    %v769 = vunpack.c.l.b16 %v134
    %v770 = vunpack.c.l.b16 %v135
    %v771 = vunpack.c.l.b16 %v136
    %v772 = vunpack.c.l.b16 %v137
    %v773 = vunpack.c.l.b16 %v138
    %v774 = vunpack.c.l.b16 %v139
    %v775 = vunpack.c.l.b16 %v140
    %v776 = vunpack.c.l.b16 %v141
    %v777 = vunpack.c.l.b16 %v142
    %v778 = vunpack.c.l.b16 %v143
    %v779 = vunpack.c.l.b16 %v144
    %v780 = vunpack.c.l.b16 %v145
    %v781 = vunpack.c.l.b16 %v146
    %v782 = vunpack.c.l.b16 %v147
    %v783 = vunpack.c.l.b16 %v148
    %v784 = vunpack.c.l.b16 %v149
    %v785 = vunpack.c.l.b16 %v150
    %v786 = vunpack.c.l.b16 %v151
    %v787 = vunpack.c.l.b16 %v152
    %v788 = vunpack.c.l.b16 %v153
    %v789 = vunpack.c.l.b16 %v154
    %v790 = vunpack.c.l.b16 %v155
    %v791 = vunpack.c.l.b16 %v156
    %v792 = vunpack.c.l.b16 %v157
    %v793 = vunpack.c.l.b16 %v158
    %v794 = vunpack.c.l.b16 %v159
    %v795 = vunpack.c.l.b16 %v160
    %v796 = vunpack.c.l.b16 %v161
    %v797 = vunpack.c.l.b16 %v162
    %v798 = vunpack.c.l.b16 %v163
    %v799 = vunpack.c.l.b16 %v164
    %v800 = vunpack.c.l.b16 %v165
    %v801 = vunpack.c.l.b16 %v166
    %v802 = vunpack.c.l.b16 %v167
    %v803 = vunpack.c.l.b16 %v168
    %v804 = vunpack.c.l.b16 %v169
    %v805 = vunpack.c.l.b16 %v170
    %v806 = vunpack.c.l.b16 %v171
    %v807 = vunpack.c.l.b16 %v172
    %v808 = vunpack.c.l.b16 %v173
    %v809 = vunpack.c.l.b16 %v174
    %v810 = vunpack.c.l.b16 %v175
    %v811 = vunpack.c.l.b16 %v176
    %v812 = vunpack.c.l.b16 %v177
    %v813 = vunpack.c.l.b16 %v178
    %v814 = vunpack.c.l.b16 %v179
    %v815 = vunpack.c.l.b16 %v180
    %v816 = vunpack.c.l.b16 %v181
    %v817 = vunpack.c.l.b16 %v182
    %v818 = vunpack.c.l.b16 %v183
    %v819 = vunpack.c.l.b16 %v184
    %v820 = vunpack.c.l.b16 %v185
    %v821 = vunpack.c.l.b16 %v186
    %v822 = vunpack.c.l.b16 %v187
    %v823 = vunpack.c.l.b16 %v188
    %v824 = vunpack.c.l.b16 %v189
    %v825 = vunpack.c.l.b16 %v190
    %v826 = vunpack.c.l.b16 %v191
    %v827 = vunpack.c.l.b16 %v192
    %v828 = vunpack.c.l.b16 %v193
    %v829 = vunpack.c.l.b16 %v194
    %v830 = vunpack.c.l.b16 %v195
    %v831 = vunpack.c.l.b16 %v196
    %v832 = vunpack.c.l.b16 %v197
    %v833 = vunpack.c.l.b16 %v198
    %v834 = vunpack.c.l.b16 %v199
    %v835 = vunpack.c.l.b16 %v200
    %v836 = vunpack.c.l.b16 %v201
    %v837 = vunpack.c.l.b16 %v202
    %v838 = vunpack.c.l.b16 %v203
    %v839 = vunpack.c.l.b16 %v204
    %v840 = vunpack.c.l.b16 %v205
    %v841 = vunpack.c.l.b16 %v206
    %v842 = vunpack.c.l.b16 %v207
    %v843 = vunpack.c.l.b16 %v208
    %v844 = vunpack.c.l.b16 %v209
    %v845 = vunpack.c.l.b16 %v210
    %v846 = vunpack.c.l.b16 %v211
    %v847 = vunpack.c.l.b16 %v212
    %v848 = vunpack.c.l.b16 %v213
    %v849 = vunpack.c.l.b16 %v214
    %v850 = vunpack.c.l.b16 %v215
    %v851 = vunpack.c.l.b16 %v216
    %v852 = vunpack.c.l.b16 %v217
    %v853 = vunpack.c.l.b16 %v218
    %v854 = vunpack.c.l.b16 %v219
    %v855 = vunpack.c.l.b16 %v220
    %v856 = vunpack.c.l.b16 %v221
    %v857 = vunpack.c.l.b16 %v222
    %v858 = vunpack.c.l.b16 %v223
    %v859 = vunpack.c.l.b16 %v224
    %v860 = vunpack.c.l.b16 %v225
    %v861 = vunpack.c.l.b16 %v226
    %v862 = vunpack.c.l.b16 %v227
    %v863 = vunpack.c.l.b16 %v228
    %v864 = vunpack.c.l.b16 %v229
    %v865 = vunpack.c.l.b16 %v230
    %v866 = vunpack.c.l.b16 %v231
    %v867 = vunpack.c.l.b16 %v232
    %v868 = vunpack.c.l.b16 %v233
    %v869 = vunpack.c.l.b16 %v234
    %v870 = vunpack.c.l.b16 %v235
    %v871 = vunpack.c.l.b16 %v236
    %v872 = vunpack.c.l.b16 %v237
    %v873 = vunpack.c.l.b16 %v238
    %v874 = vunpack.c.l.b16 %v239
    %v875 = vunpack.c.l.b16 %v240
    %v876 = vunpack.c.l.b16 %v241
    %v877 = vunpack.c.l.b16 %v242
    %v878 = vunpack.c.l.b16 %v243
    %v879 = vunpack.c.l.b16 %v244
    %v880 = vunpack.c.l.b16 %v245
    %v881 = vunpack.c.l.b16 %v246
    %v882 = vunpack.c.l.b16 %v247
    %v883 = vunpack.c.l.b16 %v248
    %v884 = vunpack.c.l.b16 %v249
    %v885 = vunpack.c.l.b16 %v250
    %v886 = vunpack.c.l.b16 %v251
    %v887 = vunpack.c.l.b16 %v252
    %v888 = vunpack.c.l.b16 %v253
    %v889 = vunpack.c.l.b16 %v254
    %v890 = vunpack.c.l.b16 %v255
    %v891 = vunpack.c.l.b16 %v256
    %v892 = vunpack.c.l.b16 %v257
    %v893 = vunpack.c.l.b16 %v258
    %v894 = vunpack.c.l.b16 %v259
    %v895 = vunpack.c.l.b16 %v260
    %v896 = vunpack.c.l.b16 %v261
    %v897 = vunpack.c.l.b16 %v262
    %v898 = vunpack.c.l.b16 %v263
    %v899 = vunpack.c.l.b16 %v264
    %v900 = vunpack.c.l.b16 %v265
    %v901 = vunpack.c.l.b16 %v266
    %v902 = vunpack.c.l.b16 %v267
    %v903 = vunpack.c.l.b16 %v268
    %v904 = vunpack.c.l.b16 %v269
    %v905 = vunpack.c.l.b16 %v270
    %v906 = vunpack.c.l.b16 %v271
    %v907 = vunpack.c.l.b16 %v272
    %v908 = vunpack.c.l.b16 %v273
    %v909 = vunpack.c.l.b16 %v274
    %v910 = vunpack.c.l.b16 %v275
    %v911 = vunpack.c.l.b16 %v276
    %v912 = vunpack.c.l.b16 %v277
    %v913 = vunpack.c.l.b16 %v278
    %v914 = vunpack.c.l.b16 %v279
    %v915 = vpack.c.b16 %v660, %v659
    %v916 = vpack.c.b16 %v662, %v661
    %v917 = vpack.c.b16 %v664, %v663
    %v918 = vpack.c.b16 %v666, %v665
    %v919 = vpack.c.b16 %v668, %v667
    %v920 = vpack.c.b16 %v670, %v669
    %v921 = vpack.c.b16 %v672, %v671
    %v922 = vpack.c.b16 %v674, %v673
    %v923 = vpack.c.b16 %v676, %v675
    %v924 = vpack.c.b16 %v678, %v677
    %v925 = vpack.c.b16 %v680, %v679
    %v926 = vpack.c.b16 %v682, %v681
    %v927 = vpack.c.b16 %v684, %v683
    %v928 = vpack.c.b16 %v686, %v685
    %v929 = vpack.c.b16 %v688, %v687
    %v930 = vpack.c.b16 %v690, %v689
    %v931 = vpack.c.b16 %v692, %v691
    %v932 = vpack.c.b16 %v694, %v693
    %v933 = vpack.c.b16 %v696, %v695
    %v934 = vpack.c.b16 %v698, %v697
    %v935 = vpack.c.b16 %v700, %v699
    %v936 = vpack.c.b16 %v702, %v701
    %v937 = vpack.c.b16 %v704, %v703
    %v938 = vpack.c.b16 %v706, %v705
    %v939 = vpack.c.b16 %v708, %v707
    %v940 = vpack.c.b16 %v710, %v709
    %v941 = vpack.c.b16 %v712, %v711
    %v942 = vpack.c.b16 %v714, %v713
    %v943 = vpack.c.b16 %v716, %v715
    %v944 = vpack.c.b16 %v718, %v717
    %v945 = vpack.c.b16 %v720, %v719
    %v946 = vpack.c.b16 %v722, %v721
    %v947 = vpack.c.b16 %v724, %v723
    %v948 = vpack.c.b16 %v726, %v725
    %v949 = vpack.c.b16 %v728, %v727
    %v950 = vpack.c.b16 %v730, %v729
    %v951 = vpack.c.b16 %v732, %v731
    %v952 = vpack.c.b16 %v734, %v733
    %v953 = vpack.c.b16 %v736, %v735
    %v954 = vpack.c.b16 %v738, %v737
    %v955 = vpack.c.b16 %v740, %v739
    %v956 = vpack.c.b16 %v742, %v741
    %v957 = vpack.c.b16 %v744, %v743
    %v958 = vpack.c.b16 %v746, %v745
    %v959 = vpack.c.b16 %v748, %v747
    %v960 = vpack.c.b16 %v750, %v749
    %v961 = vpack.c.b16 %v752, %v751
    %v962 = vpack.c.b16 %v754, %v753
    %v963 = vpack.c.b16 %v756, %v755
    %v964 = vpack.c.b16 %v758, %v757
    %v965 = vpack.c.b16 %v760, %v759
    %v966 = vpack.c.b16 %v762, %v761
    %v967 = vpack.c.b16 %v764, %v763
    %v968 = vpack.c.b16 %v766, %v765
    %v969 = vpack.c.b16 %v768, %v767
    %v970 = vpack.c.b16 %v770, %v769
    %v971 = vpack.c.b16 %v772, %v771
    %v972 = vpack.c.b16 %v774, %v773
    %v973 = vpack.c.b16 %v776, %v775
    %v974 = vpack.c.b16 %v778, %v777
    %v975 = vpack.c.b16 %v780, %v779
    %v976 = vpack.c.b16 %v782, %v781
    %v977 = vpack.c.b16 %v784, %v783
    %v978 = vpack.c.b16 %v786, %v785
    %v979 = vpack.c.b16 %v788, %v787
    %v980 = vpack.c.b16 %v790, %v789
    %v981 = vpack.c.b16 %v792, %v791
    %v982 = vpack.c.b16 %v794, %v793
    %v983 = vpack.c.b16 %v796, %v795
    %v984 = vpack.c.b16 %v798, %v797
    %v985 = vpack.c.b16 %v800, %v799
    %v986 = vpack.c.b16 %v802, %v801
    %v987 = vpack.c.b16 %v804, %v803
    %v988 = vpack.c.b16 %v806, %v805
    %v989 = vpack.c.b16 %v808, %v807
    %v990 = vpack.c.b16 %v810, %v809
    %v991 = vpack.c.b16 %v812, %v811
    %v992 = vpack.c.b16 %v814, %v813
    %v993 = vpack.c.b16 %v816, %v815
    %v994 = vpack.c.b16 %v818, %v817
    %v995 = vpack.c.b16 %v820, %v819
    %v996 = vpack.c.b16 %v822, %v821
    %v997 = vpack.c.b16 %v824, %v823
    %v998 = vpack.c.b16 %v826, %v825
    %v999 = vpack.c.b16 %v828, %v827
    %v1000 = vpack.c.b16 %v830, %v829
    %v1001 = vpack.c.b16 %v832, %v831
    %v1002 = vpack.c.b16 %v834, %v833
    %v1003 = vpack.c.b16 %v836, %v835
    %v1004 = vpack.c.b16 %v838, %v837
    %v1005 = vpack.c.b16 %v840, %v839
    %v1006 = vpack.c.b16 %v842, %v841
    %v1007 = vpack.c.b16 %v844, %v843
    %v1008 = vpack.c.b16 %v846, %v845
    %v1009 = vpack.c.b16 %v848, %v847
    %v1010 = vpack.c.b16 %v850, %v849
    %v1011 = vpack.c.b16 %v852, %v851
    %v1012 = vpack.c.b16 %v854, %v853
    %v1013 = vpack.c.b16 %v856, %v855
    %v1014 = vpack.c.b16 %v858, %v857
    %v1015 = vpack.c.b16 %v860, %v859
    %v1016 = vpack.c.b16 %v862, %v861
    %v1017 = vpack.c.b16 %v864, %v863
    %v1018 = vpack.c.b16 %v866, %v865
    %v1019 = vpack.c.b16 %v868, %v867
    %v1020 = vpack.c.b16 %v870, %v869
    %v1021 = vpack.c.b16 %v872, %v871
    %v1022 = vpack.c.b16 %v874, %v873
    %v1023 = vpack.c.b16 %v876, %v875
    %v1024 = vpack.c.b16 %v878, %v877
    %v1025 = vpack.c.b16 %v880, %v879
    %v1026 = vpack.c.b16 %v882, %v881
    %v1027 = vpack.c.b16 %v884, %v883
    %v1028 = vpack.c.b16 %v886, %v885
    %v1029 = vpack.c.b16 %v888, %v887
    %v1030 = vpack.c.b16 %v890, %v889
    %v1031 = vpack.c.b16 %v892, %v891
    %v1032 = vpack.c.b16 %v894, %v893
    %v1033 = vpack.c.b16 %v896, %v895
    %v1034 = vpack.c.b16 %v898, %v897
    %v1035 = vpack.c.b16 %v900, %v899
    %v1036 = vpack.c.b16 %v902, %v901
    %v1037 = vpack.c.b16 %v904, %v903
    %v1038 = vpack.c.b16 %v906, %v905
    %v1039 = vpack.c.b16 %v908, %v907
    %v1040 = vpack.c.b16 %v910, %v909
    %v1041 = vpack.c.b16 %v912, %v911
    %v1042 = vpack.c.b16 %v914, %v913
    %1171 = vmatprep.subr.bf16.mxu0 0
    %1172 = vmatpush1.bf16.msra.mxu0 %v915
    %1173 = vmatprep.subr.bf16.mxu0 0
    %1174 = vmatpush1.bf16.msra.mxu0 %v916
    %1175 = vmatprep.subr.bf16.mxu0 0
    %1176 = vmatpush1.bf16.msra.mxu0 %v917
    %1177 = vmatprep.subr.bf16.mxu0 0
    %1178 = vmatpush1.bf16.msra.mxu0 %v918
    %1179 = vmatprep.subr.bf16.mxu0 0
    %1180 = vmatpush1.bf16.msra.mxu0 %v919
    %1181 = vmatprep.subr.bf16.mxu0 0
    %1182 = vmatpush1.bf16.msra.mxu0 %v920
    %1183 = vmatprep.subr.bf16.mxu0 0
    %1184 = vmatpush1.bf16.msra.mxu0 %v921
    %1185 = vmatprep.subr.bf16.mxu0 0
    %1186 = vmatpush1.bf16.msra.mxu0 %v922
    %1187 = vmatprep.subr.bf16.mxu0 0
    %1188 = vmatpush1.bf16.msra.mxu0 %v923
    %1189 = vmatprep.subr.bf16.mxu0 0
    %1190 = vmatpush1.bf16.msra.mxu0 %v924
    %1191 = vmatprep.subr.bf16.mxu0 0
    %1192 = vmatpush1.bf16.msra.mxu0 %v925
    %1193 = vmatprep.subr.bf16.mxu0 0
    %1194 = vmatpush1.bf16.msra.mxu0 %v926
    %1195 = vmatprep.subr.bf16.mxu0 0
    %1196 = vmatpush1.bf16.msra.mxu0 %v927
    %1197 = vmatprep.subr.bf16.mxu0 0
    %1198 = vmatpush1.bf16.msra.mxu0 %v928
    %1199 = vmatprep.subr.bf16.mxu0 0
    %1200 = vmatpush1.bf16.msra.mxu0 %v929
    %1201 = vmatprep.subr.bf16.mxu0 0
    %1202 = vmatpush1.bf16.msra.mxu0 %v930
    %1203 = vmatprep.mubr.bf16.mxu0 %v326
    %1204 = vmatmul.mubr.bf16.gmra.mrb[0].mxu0 %v312
    %v1205 = vpop.f32.mrb[0].mxu0
    %v1206 = vadd.f32 %v285, %v1205
    %v1207 = vpop.f32.mrb[0].mxu0
    %v1208 = vpop.f32.mrb[0].mxu0
    %v1209 = vpop.f32.mrb[0].mxu0
    %1210 = vdwg.mxu0
    %1211 = vmatprep.subr.bf16.mxu0 0
    %1212 = vmatpush1.bf16.msra.mxu0 %v931
    %1213 = vmatprep.subr.bf16.mxu0 0
    %1214 = vmatpush1.bf16.msra.mxu0 %v932
    %1215 = vmatprep.subr.bf16.mxu0 0
    %1216 = vmatpush1.bf16.msra.mxu0 %v933
    %1217 = vmatprep.subr.bf16.mxu0 0
    %1218 = vmatpush1.bf16.msra.mxu0 %v934
    %1219 = vmatprep.subr.bf16.mxu0 0
    %1220 = vmatpush1.bf16.msra.mxu0 %v935
    %1221 = vmatprep.subr.bf16.mxu0 0
    %1222 = vmatpush1.bf16.msra.mxu0 %v936
    %1223 = vmatprep.subr.bf16.mxu0 0
    %1224 = vmatpush1.bf16.msra.mxu0 %v937
    %1225 = vmatprep.subr.bf16.mxu0 0
    %1226 = vmatpush1.bf16.msra.mxu0 %v938
    %1227 = vmatprep.subr.bf16.mxu0 0
    %1228 = vmatpush1.bf16.msra.mxu0 %v939
    %1229 = vmatprep.subr.bf16.mxu0 0
    %1230 = vmatpush1.bf16.msra.mxu0 %v940
    %1231 = vmatprep.subr.bf16.mxu0 0
    %1232 = vmatpush1.bf16.msra.mxu0 %v941
    %1233 = vmatprep.subr.bf16.mxu0 0
    %1234 = vmatpush1.bf16.msra.mxu0 %v942
    %1235 = vmatprep.subr.bf16.mxu0 0
    %1236 = vmatpush1.bf16.msra.mxu0 %v943
    %1237 = vmatprep.subr.bf16.mxu0 0
    %1238 = vmatpush1.bf16.msra.mxu0 %v944
    %1239 = vmatprep.subr.bf16.mxu0 0
    %1240 = vmatpush1.bf16.msra.mxu0 %v945
    %1241 = vmatprep.subr.bf16.mxu0 0
    %1242 = vmatpush1.bf16.msra.mxu0 %v946
    %1243 = vmatprep.mubr.bf16.mxu0 %v336
    %1244 = vmatmul.mubr.bf16.gmra.mrb[0].mxu0 %v334
    %v1245 = vpop.f32.mrb[0].mxu0
    %v1246 = vadd.f32 %v1206, %v1245
    %v1247 = vpop.f32.mrb[0].mxu0
    %v1248 = vpop.f32.mrb[0].mxu0
    %v1249 = vpop.f32.mrb[0].mxu0
    %1250 = vdwg.mxu0
    %1251 = vmatprep.subr.bf16.mxu0 0
    %1252 = vmatpush1.bf16.msra.mxu0 %v947
    %1253 = vmatprep.subr.bf16.mxu0 0
    %1254 = vmatpush1.bf16.msra.mxu0 %v948
    %1255 = vmatprep.subr.bf16.mxu0 0
    %1256 = vmatpush1.bf16.msra.mxu0 %v949
    %1257 = vmatprep.subr.bf16.mxu0 0
    %1258 = vmatpush1.bf16.msra.mxu0 %v950
    %1259 = vmatprep.subr.bf16.mxu0 0
    %1260 = vmatpush1.bf16.msra.mxu0 %v951
    %1261 = vmatprep.subr.bf16.mxu0 0
    %1262 = vmatpush1.bf16.msra.mxu0 %v952
    %1263 = vmatprep.subr.bf16.mxu0 0
    %1264 = vmatpush1.bf16.msra.mxu0 %v953
    %1265 = vmatprep.subr.bf16.mxu0 0
    %1266 = vmatpush1.bf16.msra.mxu0 %v954
    %1267 = vmatprep.subr.bf16.mxu0 0
    %1268 = vmatpush1.bf16.msra.mxu0 %v955
    %1269 = vmatprep.subr.bf16.mxu0 0
    %1270 = vmatpush1.bf16.msra.mxu0 %v956
    %1271 = vmatprep.subr.bf16.mxu0 0
    %1272 = vmatpush1.bf16.msra.mxu0 %v957
    %1273 = vmatprep.subr.bf16.mxu0 0
    %1274 = vmatpush1.bf16.msra.mxu0 %v958
    %1275 = vmatprep.subr.bf16.mxu0 0
    %1276 = vmatpush1.bf16.msra.mxu0 %v959
    %1277 = vmatprep.subr.bf16.mxu0 0
    %1278 = vmatpush1.bf16.msra.mxu0 %v960
    %1279 = vmatprep.subr.bf16.mxu0 0
    %1280 = vmatpush1.bf16.msra.mxu0 %v961
    %1281 = vmatprep.subr.bf16.mxu0 0
    %1282 = vmatpush1.bf16.msra.mxu0 %v962
    %1283 = vmatprep.mubr.bf16.mxu0 %v333
    %1284 = vmatmul.mubr.bf16.gmra.mrb[0].mxu0 %v319
    %v1285 = vpop.f32.mrb[0].mxu0
    %v1286 = vadd.f32 %v1246, %v1285
    %v1287 = vpop.f32.mrb[0].mxu0
    %v1288 = vpop.f32.mrb[0].mxu0
    %v1289 = vpop.f32.mrb[0].mxu0
    %1290 = vdwg.mxu0
    %1291 = vmatprep.subr.bf16.mxu0 0
    %1292 = vmatpush1.bf16.msra.mxu0 %v963
    %1293 = vmatprep.subr.bf16.mxu0 0
    %1294 = vmatpush1.bf16.msra.mxu0 %v964
    %1295 = vmatprep.subr.bf16.mxu0 0
    %1296 = vmatpush1.bf16.msra.mxu0 %v965
    %1297 = vmatprep.subr.bf16.mxu0 0
    %1298 = vmatpush1.bf16.msra.mxu0 %v966
    %1299 = vmatprep.subr.bf16.mxu0 0
    %1300 = vmatpush1.bf16.msra.mxu0 %v967
    %1301 = vmatprep.subr.bf16.mxu0 0
    %1302 = vmatpush1.bf16.msra.mxu0 %v968
    %1303 = vmatprep.subr.bf16.mxu0 0
    %1304 = vmatpush1.bf16.msra.mxu0 %v969
    %1305 = vmatprep.subr.bf16.mxu0 0
    %1306 = vmatpush1.bf16.msra.mxu0 %v970
    %1307 = vmatprep.subr.bf16.mxu0 0
    %1308 = vmatpush1.bf16.msra.mxu0 %v971
    %1309 = vmatprep.subr.bf16.mxu0 0
    %1310 = vmatpush1.bf16.msra.mxu0 %v972
    %1311 = vmatprep.subr.bf16.mxu0 0
    %1312 = vmatpush1.bf16.msra.mxu0 %v973
    %1313 = vmatprep.subr.bf16.mxu0 0
    %1314 = vmatpush1.bf16.msra.mxu0 %v974
    %1315 = vmatprep.subr.bf16.mxu0 0
    %1316 = vmatpush1.bf16.msra.mxu0 %v975
    %1317 = vmatprep.subr.bf16.mxu0 0
    %1318 = vmatpush1.bf16.msra.mxu0 %v976
    %1319 = vmatprep.subr.bf16.mxu0 0
    %1320 = vmatpush1.bf16.msra.mxu0 %v977
    %1321 = vmatprep.subr.bf16.mxu0 0
    %1322 = vmatpush1.bf16.msra.mxu0 %v978
    %1323 = vmatprep.mubr.bf16.mxu0 %v337
    %1324 = vmatmul.mubr.bf16.gmra.mrb[0].mxu0 %v335
    %v1325 = vpop.f32.mrb[0].mxu0
    %v1326 = vadd.f32 %v1286, %v1325
    %v1327 = vpop.f32.mrb[0].mxu0
    %v1328 = vpop.f32.mrb[0].mxu0
    %v1329 = vpop.f32.mrb[0].mxu0
    %1330 = vdwg.mxu0
    %1331 = vmatprep.subr.bf16.mxu0 0
    %1332 = vmatpush1.bf16.msra.mxu0 %v979
    %1333 = vmatprep.subr.bf16.mxu0 0
    %1334 = vmatpush1.bf16.msra.mxu0 %v980
    %1335 = vmatprep.subr.bf16.mxu0 0
    %1336 = vmatpush1.bf16.msra.mxu0 %v981
    %1337 = vmatprep.subr.bf16.mxu0 0
    %1338 = vmatpush1.bf16.msra.mxu0 %v982
    %1339 = vmatprep.subr.bf16.mxu0 0
    %1340 = vmatpush1.bf16.msra.mxu0 %v983
    %1341 = vmatprep.subr.bf16.mxu0 0
    %1342 = vmatpush1.bf16.msra.mxu0 %v984
    %1343 = vmatprep.subr.bf16.mxu0 0
    %1344 = vmatpush1.bf16.msra.mxu0 %v985
    %1345 = vmatprep.subr.bf16.mxu0 0
    %1346 = vmatpush1.bf16.msra.mxu0 %v986
    %1347 = vmatprep.subr.bf16.mxu0 0
    %1348 = vmatpush1.bf16.msra.mxu0 %v987
    %1349 = vmatprep.subr.bf16.mxu0 0
    %1350 = vmatpush1.bf16.msra.mxu0 %v988
    %1351 = vmatprep.subr.bf16.mxu0 0
    %1352 = vmatpush1.bf16.msra.mxu0 %v989
    %1353 = vmatprep.subr.bf16.mxu0 0
    %1354 = vmatpush1.bf16.msra.mxu0 %v990
    %1355 = vmatprep.subr.bf16.mxu0 0
    %1356 = vmatpush1.bf16.msra.mxu0 %v991
    %1357 = vmatprep.subr.bf16.mxu0 0
    %1358 = vmatpush1.bf16.msra.mxu0 %v992
    %1359 = vmatprep.subr.bf16.mxu0 0
    %1360 = vmatpush1.bf16.msra.mxu0 %v993
    %1361 = vmatprep.subr.bf16.mxu0 0
    %1362 = vmatpush1.bf16.msra.mxu0 %v994
    %1363 = vmatprep.mubr.bf16.mxu0 %v375
    %1364 = vmatmul.mubr.bf16.gmra.mrb[0].mxu0 %v361
    %v1365 = vpop.f32.mrb[0].mxu0
    %v1366 = vadd.f32 %v1326, %v1365
    %v1367 = vpop.f32.mrb[0].mxu0
    %v1368 = vpop.f32.mrb[0].mxu0
    %v1369 = vpop.f32.mrb[0].mxu0
    %1370 = vdwg.mxu0
    %1371 = vmatprep.subr.bf16.mxu0 0
    %1372 = vmatpush1.bf16.msra.mxu0 %v995
    %1373 = vmatprep.subr.bf16.mxu0 0
    %1374 = vmatpush1.bf16.msra.mxu0 %v996
    %1375 = vmatprep.subr.bf16.mxu0 0
    %1376 = vmatpush1.bf16.msra.mxu0 %v997
    %1377 = vmatprep.subr.bf16.mxu0 0
    %1378 = vmatpush1.bf16.msra.mxu0 %v998
    %1379 = vmatprep.subr.bf16.mxu0 0
    %1380 = vmatpush1.bf16.msra.mxu0 %v999
    %1381 = vmatprep.subr.bf16.mxu0 0
    %1382 = vmatpush1.bf16.msra.mxu0 %v1000
    %1383 = vmatprep.subr.bf16.mxu0 0
    %1384 = vmatpush1.bf16.msra.mxu0 %v1001
    %1385 = vmatprep.subr.bf16.mxu0 0
    %1386 = vmatpush1.bf16.msra.mxu0 %v1002
    %1387 = vmatprep.subr.bf16.mxu0 0
    %1388 = vmatpush1.bf16.msra.mxu0 %v1003
    %1389 = vmatprep.subr.bf16.mxu0 0
    %1390 = vmatpush1.bf16.msra.mxu0 %v1004
    %1391 = vmatprep.subr.bf16.mxu0 0
    %1392 = vmatpush1.bf16.msra.mxu0 %v1005
    %1393 = vmatprep.subr.bf16.mxu0 0
    %1394 = vmatpush1.bf16.msra.mxu0 %v1006
    %1395 = vmatprep.subr.bf16.mxu0 0
    %1396 = vmatpush1.bf16.msra.mxu0 %v1007
    %1397 = vmatprep.subr.bf16.mxu0 0
    %1398 = vmatpush1.bf16.msra.mxu0 %v1008
    %1399 = vmatprep.subr.bf16.mxu0 0
    %1400 = vmatpush1.bf16.msra.mxu0 %v1009
    %1401 = vmatprep.subr.bf16.mxu0 0
    %1402 = vmatpush1.bf16.msra.mxu0 %v1010
    %1403 = vmatprep.mubr.bf16.mxu0 %v385
    %1404 = vmatmul.mubr.bf16.gmra.mrb[0].mxu0 %v383
    %v1405 = vpop.f32.mrb[0].mxu0
    %v1406 = vadd.f32 %v1366, %v1405
    %v1407 = vpop.f32.mrb[0].mxu0
    %v1408 = vpop.f32.mrb[0].mxu0
    %v1409 = vpop.f32.mrb[0].mxu0
    %1410 = vdwg.mxu0
    %1411 = vmatprep.subr.bf16.mxu0 0
    %1412 = vmatpush1.bf16.msra.mxu0 %v1011
    %1413 = vmatprep.subr.bf16.mxu0 0
    %1414 = vmatpush1.bf16.msra.mxu0 %v1012
    %1415 = vmatprep.subr.bf16.mxu0 0
    %1416 = vmatpush1.bf16.msra.mxu0 %v1013
    %1417 = vmatprep.subr.bf16.mxu0 0
    %1418 = vmatpush1.bf16.msra.mxu0 %v1014
    %1419 = vmatprep.subr.bf16.mxu0 0
    %1420 = vmatpush1.bf16.msra.mxu0 %v1015
    %1421 = vmatprep.subr.bf16.mxu0 0
    %1422 = vmatpush1.bf16.msra.mxu0 %v1016
    %1423 = vmatprep.subr.bf16.mxu0 0
    %1424 = vmatpush1.bf16.msra.mxu0 %v1017
    %1425 = vmatprep.subr.bf16.mxu0 0
    %1426 = vmatpush1.bf16.msra.mxu0 %v1018
    %1427 = vmatprep.subr.bf16.mxu0 0
    %1428 = vmatpush1.bf16.msra.mxu0 %v1019
    %1429 = vmatprep.subr.bf16.mxu0 0
    %1430 = vmatpush1.bf16.msra.mxu0 %v1020
    %1431 = vmatprep.subr.bf16.mxu0 0
    %1432 = vmatpush1.bf16.msra.mxu0 %v1021
    %1433 = vmatprep.subr.bf16.mxu0 0
    %1434 = vmatpush1.bf16.msra.mxu0 %v1022
    %1435 = vmatprep.subr.bf16.mxu0 0
    %1436 = vmatpush1.bf16.msra.mxu0 %v1023
    %1437 = vmatprep.subr.bf16.mxu0 0
    %1438 = vmatpush1.bf16.msra.mxu0 %v1024
    %1439 = vmatprep.subr.bf16.mxu0 0
    %1440 = vmatpush1.bf16.msra.mxu0 %v1025
    %1441 = vmatprep.subr.bf16.mxu0 0
    %1442 = vmatpush1.bf16.msra.mxu0 %v1026
    %1443 = vmatprep.mubr.bf16.mxu0 %v382
    %1444 = vmatmul.mubr.bf16.gmra.mrb[0].mxu0 %v368
    %v1445 = vpop.f32.mrb[0].mxu0
    %v1446 = vadd.f32 %v1406, %v1445
    %v1447 = vpop.f32.mrb[0].mxu0
    %v1448 = vpop.f32.mrb[0].mxu0
    %v1449 = vpop.f32.mrb[0].mxu0
    %1450 = vdwg.mxu0
    %1451 = vmatprep.subr.bf16.mxu0 0
    %1452 = vmatpush1.bf16.msra.mxu0 %v1027
    %1453 = vmatprep.subr.bf16.mxu0 0
    %1454 = vmatpush1.bf16.msra.mxu0 %v1028
    %1455 = vmatprep.subr.bf16.mxu0 0
    %1456 = vmatpush1.bf16.msra.mxu0 %v1029
    %1457 = vmatprep.subr.bf16.mxu0 0
    %1458 = vmatpush1.bf16.msra.mxu0 %v1030
    %1459 = vmatprep.subr.bf16.mxu0 0
    %1460 = vmatpush1.bf16.msra.mxu0 %v1031
    %1461 = vmatprep.subr.bf16.mxu0 0
    %1462 = vmatpush1.bf16.msra.mxu0 %v1032
    %1463 = vmatprep.subr.bf16.mxu0 0
    %1464 = vmatpush1.bf16.msra.mxu0 %v1033
    %1465 = vmatprep.subr.bf16.mxu0 0
    %1466 = vmatpush1.bf16.msra.mxu0 %v1034
    %1467 = vmatprep.subr.bf16.mxu0 0
    %1468 = vmatpush1.bf16.msra.mxu0 %v1035
    %1469 = vmatprep.subr.bf16.mxu0 0
    %1470 = vmatpush1.bf16.msra.mxu0 %v1036
    %1471 = vmatprep.subr.bf16.mxu0 0
    %1472 = vmatpush1.bf16.msra.mxu0 %v1037
    %1473 = vmatprep.subr.bf16.mxu0 0
    %1474 = vmatpush1.bf16.msra.mxu0 %v1038
    %1475 = vmatprep.subr.bf16.mxu0 0
    %1476 = vmatpush1.bf16.msra.mxu0 %v1039
    %1477 = vmatprep.subr.bf16.mxu0 0
    %1478 = vmatpush1.bf16.msra.mxu0 %v1040
    %1479 = vmatprep.subr.bf16.mxu0 0
    %1480 = vmatpush1.bf16.msra.mxu0 %v1041
    %1481 = vmatprep.subr.bf16.mxu0 0
    %1482 = vmatpush1.bf16.msra.mxu0 %v1042
    %1483 = vmatprep.mubr.bf16.mxu0 %v386
    %1484 = vmatmul.mubr.bf16.gmra.mrb[0].mxu0 %v384
    %v1485 = vpop.f32.mrb[0].mxu0
    %v1486 = vadd.f32 %v1446, %v1485
    %v1487 = vpop.f32.mrb[0].mxu0
    %v1488 = vpop.f32.mrb[0].mxu0
    %v1489 = vpop.f32.mrb[0].mxu0
    %1490 = vdwg.mxu0
    %v1491 = vmax.f32 %v1486, 0.0
    %v1492 = vpack.c.bf16 %v1491, %v1491
    %v1493 = vld [vmem:[%s3] sm:$0xf]
    %v1494 = vld [vmem:[%s3 + $0x4] sm:$0xf]
    %v1495 = vld [vmem:[%s3 + $0x8] sm:$0xf]
    %v1496 = vld [vmem:[%s3 + $0xc] sm:$0xf]
    %v1497 = vld [vmem:[%s3 + $0x10] sm:$0xf]
    %v1498 = vld [vmem:[%s3 + $0x14] sm:$0xf]
    %v1499 = vld [vmem:[%s3 + $0x18] sm:$0xf]
    %v1500 = vld [vmem:[%s3 + $0x1c] sm:$0xf]
    %v1501 = vld [vmem:[%s3 + $0x20] sm:$0xf]
    %v1502 = vld [vmem:[%s3 + $0x24] sm:$0xf]
    %v1503 = vld [vmem:[%s3 + $0x28] sm:$0xf]
    %v1504 = vld [vmem:[%s3 + $0x2c] sm:$0xf]
    %v1505 = vld [vmem:[%s3 + $0x30] sm:$0xf]
    %v1506 = vld [vmem:[%s3 + $0x34] sm:$0xf]
    %v1507 = vld [vmem:[%s3 + $0x38] sm:$0xf]
    %v1508 = vld [vmem:[%s3 + $0x3c] sm:$0xf]
    %v1509 = vld [vmem:[%s4] sm:$0x1]
    %v1511 = vlaneseq
    %v1512 = vshrl.u32 %v1511, 7
    %v1513 = vsub.s32 0, %v1512
    %v1514 = vrot.slane %v1509, %v1513
    %v1532 = vunpack.c.l.b16 %v1493
    %v1533 = vunpack.c.l.b16 %v1494
    %v1534 = vunpack.c.l.b16 %v1495
    %v1535 = vunpack.c.l.b16 %v1496
    %v1536 = vunpack.c.l.b16 %v1497
    %v1537 = vunpack.c.l.b16 %v1498
    %v1538 = vunpack.c.l.b16 %v1499
    %v1539 = vunpack.c.l.b16 %v1500
    %v1540 = vunpack.c.l.b16 %v1501
    %v1541 = vunpack.c.l.b16 %v1502
    %v1542 = vunpack.c.l.b16 %v1503
    %v1543 = vunpack.c.l.b16 %v1504
    %v1544 = vunpack.c.l.b16 %v1505
    %v1545 = vunpack.c.l.b16 %v1506
    %v1546 = vunpack.c.l.b16 %v1507
    %v1547 = vunpack.c.l.b16 %v1508
    %v1548 = vpack.c.b16 %v1533, %v1532
    %v1549 = vpack.c.b16 %v1535, %v1534
    %v1550 = vpack.c.b16 %v1537, %v1536
    %v1551 = vpack.c.b16 %v1539, %v1538
    %v1552 = vpack.c.b16 %v1541, %v1540
    %v1553 = vpack.c.b16 %v1543, %v1542
    %v1554 = vpack.c.b16 %v1545, %v1544
    %v1555 = vpack.c.b16 %v1547, %v1546
    %1564 = vmatprep.subr.bf16.mxu0 0
    %1565 = vmatpush1.bf16.msra.mxu0 %v1548
    %1566 = vmatprep.subr.bf16.mxu0 0
    %1567 = vmatpush1.bf16.msra.mxu0 %v1549
    %1568 = vmatprep.subr.bf16.mxu0 0
    %1569 = vmatpush1.bf16.msra.mxu0 %v1550
    %1570 = vmatprep.subr.bf16.mxu0 0
    %1571 = vmatpush1.bf16.msra.mxu0 %v1551
    %1572 = vmatprep.subr.bf16.mxu0 0
    %1573 = vmatpush1.bf16.msra.mxu0 %v1552
    %1574 = vmatprep.subr.bf16.mxu0 0
    %1575 = vmatpush1.bf16.msra.mxu0 %v1553
    %1576 = vmatprep.subr.bf16.mxu0 0
    %1577 = vmatpush1.bf16.msra.mxu0 %v1554
    %1578 = vmatprep.subr.bf16.mxu0 0
    %1579 = vmatpush1.bf16.msra.mxu0 %v1555
    %1580 = vmatprep.subr.bf16.mxu0 0
    %1581 = vmatpush1.bf16.msra.mxu0 0
    %1582 = vmatprep.subr.bf16.mxu0 0
    %1583 = vmatpush1.bf16.msra.mxu0 0
    %1584 = vmatprep.subr.bf16.mxu0 0
    %1585 = vmatpush1.bf16.msra.mxu0 0
    %1586 = vmatprep.subr.bf16.mxu0 0
    %1587 = vmatpush1.bf16.msra.mxu0 0
    %1588 = vmatprep.subr.bf16.mxu0 0
    %1589 = vmatpush1.bf16.msra.mxu0 0
    %1590 = vmatprep.subr.bf16.mxu0 0
    %1591 = vmatpush1.bf16.msra.mxu0 0
    %1592 = vmatprep.subr.bf16.mxu0 0
    %1593 = vmatpush1.bf16.msra.mxu0 0
    %1594 = vmatprep.subr.bf16.mxu0 0
    %1595 = vmatpush1.bf16.msra.mxu0 0
    %1596 = vmatprep.mubr.bf16.mxu0 0
    %1597 = vmatmul.mubr.bf16.gmra.mrb[0].mxu0 %v1492
    %v1598 = vpop.f32.mrb[0].mxu0
    %v1599 = vadd.f32 %v1514, %v1598
    %v1600 = vpop.f32.mrb[0].mxu0
    %v1601 = vpop.f32.mrb[0].mxu0
    %v1602 = vpop.f32.mrb[0].mxu0
    %1603 = vdwg.mxu0
    %vm1604 = vcmask 74752
    %1605 = vst.msk [vmem:[#allocation2] sm:$0x3] %vm1604, %v1599
    // Predicated region
    $region22: #{simple_cnn_forward.3} parent=1 // pred_check
      _
    $region23: #{simple_cnn_forward.3} parent=1 // pred_check_branch
      %1607 = sbr.rel (0) target = $region25
    $region24: #{simple_cnn_forward.3} parent=1 // pred_region
      %s1609 = ssub.s32 32, 32
      %1610 = vsyncadd [#allocation3], %s1609
      %s1612 = sshll.u32 [#allocation2], 4
      %s1613 = int_to_ptr.vmem [resolvable:$true] %s1612
      %1615 = dma.vmem_to_hbm [thread:$0]  %s1613, 32, %s5, [#allocation3]
    $region25: #{simple_cnn_forward.3} parent=1 // pred_fallthru
      _
    // Predicated region
    $region26: #{simple_cnn_forward.3} parent=1 // pred_check
      _
    $region27: #{simple_cnn_forward.3} parent=1 // pred_check_branch
      %1617 = sbr.rel (0) target = $region29
    $region28: #{simple_cnn_forward.3} parent=1 // pred_region
      %1618 = dma.done [#allocation3], 32
    $region29: #{simple_cnn_forward.3} parent=1 // pred_fallthru
      _
    %1619 = vsyncpa [#allocation3], 1

</llo_original>
